<compile_context>
chip_gen: v5e
topology: v5e:2x2
jax: 0.10.0
libtpu: 0.0.40
codegen_flags: <defaults>
</compile_context>

<pallas_src>
import jax
import jax.numpy as jnp
from jax.experimental import pallas as pl
from jax.experimental.pallas import tpu as pltpu


# ----------------------------------------------------------------------------
# Encoder kernel: one grid step processes Bt sequences.
# Single-head self-attention with additive key-padding bias, residual + LN,
# GELU FFN, residual + LN.  Only the CLS (position 0) row is computed past the
# K/V projection and only that row is written out.
# ----------------------------------------------------------------------------
def encoder_layer_kernel(x_ref, bias_ref,
                         wq_ref, wkv_ref, wo_ref,
                         ln1_g_ref, ln1_b_ref,
                         w1_ref, b1_ref, w2_ref, b2_ref,
                         ln2_g_ref, ln2_b_ref,
                         cls_ref):
    x = x_ref[...]                                   # (Bt, S, H) f32
    Bt, S, H = x.shape
    rows = Bt * S
    x2 = x.reshape(rows, H)                          # flattened MXU slab

    # Fused K|V projection for every token: one (rows, H) x (H, 2H) bf16 matmul,
    # f32 accumulation.
    kv = jnp.dot(x2.astype(jnp.bfloat16), wkv_ref[...],
                 preferred_element_type=jnp.float32)           # (rows, 2H)
    k = kv[:, 0 * H:1 * H].reshape(Bt, S, H)
    v = kv[:, 1 * H:2 * H].reshape(Bt, S, H)

    # Q only for the CLS token.  The model only uses encoder output [:, 0, :] and every
    # post-attention op is row-wise, so for this single-layer encoder this is exact.
    x_cls = x[:, 0, :]                                         # (Bt, H)
    q_cls = jnp.dot(x_cls.astype(jnp.bfloat16), wq_ref[...],
                    preferred_element_type=jnp.float32)[:, None, :]   # (Bt, 1, H)

    scale = 1.0 / (H ** 0.5)
    # Batched score matmul; contraction on the last dim of both operands (no k.T).
    s = jnp.einsum('bqd,bkd->bqk',
                   q_cls.astype(jnp.bfloat16), k.astype(jnp.bfloat16),
                   preferred_element_type=jnp.float32) * scale  # (Bt, 1, S)
    s = s + bias_ref[...]                            # additive key-pad bias {0, -1e9}
    s = s - s.max(axis=-1, keepdims=True)
    p = jnp.exp(s)
    p = p * pl.reciprocal(p.sum(axis=-1, keepdims=True), approx=True)

    ctx = jnp.einsum('bqk,bkd->bqd',
                     p.astype(jnp.bfloat16), v.astype(jnp.bfloat16),
                     preferred_element_type=jnp.float32)        # (Bt, 1, H)
    attn = jnp.dot(ctx[:, 0, :].astype(jnp.bfloat16), wo_ref[...],
                   preferred_element_type=jnp.float32)          # (Bt, H)

    # residual + layernorm 1 (f32 VPU math), CLS rows only
    h = x_cls + attn
    mu = h.mean(axis=-1, keepdims=True)
    var = ((h - mu) ** 2).mean(axis=-1, keepdims=True)
    h = (h - mu) * jax.lax.rsqrt(var + 1e-5) * ln1_g_ref[...] + ln1_b_ref[...]

    # FFN (bf16 MXU, f32 elementwise), CLS rows only
    f = jnp.dot(h.astype(jnp.bfloat16), w1_ref[...],
                preferred_element_type=jnp.float32) + b1_ref[...]
    # TODO(synk): PyTorch nn.GELU defaults to exact erf GELU; tanh approximation used here.
    f = jax.nn.gelu(f)
    f = jnp.dot(f.astype(jnp.bfloat16), w2_ref[...],
                preferred_element_type=jnp.float32) + b2_ref[...]

    # residual + layernorm 2
    h2 = h + f
    mu2 = h2.mean(axis=-1, keepdims=True)
    var2 = ((h2 - mu2) ** 2).mean(axis=-1, keepdims=True)
    y = (h2 - mu2) * jax.lax.rsqrt(var2 + 1e-5) * ln2_g_ref[...] + ln2_b_ref[...]

    # Lane-dense write of only the CLS row of each sequence back to HBM.
    cls_ref[...] = y[:, None, :]


def _pick_batch_tile(n, cap=8):
    """Largest divisor of n (<= cap) that still yields a grid of >= 2 steps.

    cap keeps the (Bt, S, H) input slab + (Bt*S, 2H) KV block + double-buffered
    weights inside VMEM at production sizes (64 MiB physical on v7x).
    """
    if n < 2:
        return max(n, 1)
    best = 1
    for d in range(1, min(n, cap) + 1):
        if n % d == 0 and n // d >= 2:
            best = max(best, d)
    return best


def encoder_forward(x, key_bias, params):
    N, S, H = x.shape
    F = params["w1"].shape[1]
    Bt = _pick_batch_tile(N)

    def const_spec(shape):
        nd = len(shape)
        return pl.BlockSpec(shape, lambda b, _nd=nd: (0,) * _nd)

    out = pl.pallas_call(
        encoder_layer_kernel,
        out_shape=jax.ShapeDtypeStruct((N, 1, H), jnp.float32),
        grid=(N // Bt,),
        in_specs=[
            pl.BlockSpec((Bt, S, H), lambda b: (b, 0, 0)),   # x
            pl.BlockSpec((Bt, 1, S), lambda b: (b, 0, 0)),   # additive key-padding bias
            const_spec((H, H)),                              # Wq (bf16)
            const_spec((H, 2 * H)),                          # fused Wkv (bf16)
            const_spec((H, H)),                              # Wo (bf16)
            const_spec((1, H)), const_spec((1, H)),          # ln1 gamma/beta
            const_spec((H, F)), const_spec((1, F)),          # W1 (bf16), b1
            const_spec((F, H)), const_spec((1, H)),          # W2 (bf16), b2
            const_spec((1, H)), const_spec((1, H)),          # ln2 gamma/beta
        ],
        out_specs=pl.BlockSpec((Bt, 1, H), lambda b: (b, 0, 0)),
        compiler_params=pltpu.CompilerParams(
            dimension_semantics=("parallel",),
            vmem_limit_bytes=48 * 1024 * 1024),              # headroom on v7x (64 MiB phys)
    )(x, key_bias,
      params["wq"], params["wkv"], params["wo"],
      params["ln1_g"], params["ln1_b"],
      params["w1"], params["b1"], params["w2"], params["b2"],
      params["ln2_g"], params["ln2_b"])
    return out[:, 0, :]                                      # (N, H) CLS embeddings


# ----------------------------------------------------------------------------
# Clone-detection head.  Inputs are CLS embeddings of anchor / pos / neg padded to a
# sublane-multiple row count (Bp), plus labels (Bp,1) and a row-validity mask.
# Reproduces:
#   prob_1 = (o0*o1).sum(-1)*20 ; prob_2 = (o0*o2).sum(-1)*20
#   prob_3 = o0 @ cat(o0,o1).T * 20, masked (-1e9) where labels match (incl. self)
#   prob   = softmax([prob_1, prob_2, prob_3], -1) ; loss = -mean(log(prob[:,0] + 1e-10))
# Padded rows/columns are excluded via the validity mask; math is exact f32 for parity.
# ----------------------------------------------------------------------------
def head_kernel(o0_ref, o1_ref, o2_ref, lab_ref, valid_ref, loss_ref):
    o0 = o0_ref[...]                                 # (Bp, H) f32 (padded rows = 0)
    o1 = o1_ref[...]
    o2 = o2_ref[...]
    lab = lab_ref[...]                               # (Bp, 1) int32 (padded rows = -1)
    valid = valid_ref[...]                           # (Bp, 1) f32

    prob_1 = (o0 * o1).sum(axis=-1, keepdims=True) * 20.0     # (Bp, 1)
    prob_2 = (o0 * o2).sum(axis=-1, keepdims=True) * 20.0     # (Bp, 1)

    # o0 @ cat(o0, o1).T split in halves; contract last dims (no transpose materialized).
    dn = (((1,), (1,)), ((), ()))
    s_aa = jax.lax.dot_general(o0, o0, dn, preferred_element_type=jnp.float32) * 20.0
    s_ab = jax.lax.dot_general(o0, o1, dn, preferred_element_type=jnp.float32) * 20.0

    # mask = labels[:,None] == cat(labels,labels)[None,:]; also exclude padded columns.
    match = (lab == lab.T).astype(jnp.float32)                 # (Bp, Bp)
    excl = jnp.maximum(match, 1.0 - valid.T)
    s_aa = s_aa * (1.0 - excl) - 1e9 * excl
    s_ab = s_ab * (1.0 - excl) - 1e9 * excl

    # softmax over [prob_1 | prob_2 | s_aa | s_ab] per row, take slot 0 (== prob[:,0]).
    row_max = jnp.maximum(
        jnp.maximum(prob_1, prob_2),
        jnp.maximum(s_aa.max(axis=-1, keepdims=True), s_ab.max(axis=-1, keepdims=True)))
    e1 = jnp.exp(prob_1 - row_max)
    e2 = jnp.exp(prob_2 - row_max)
    denom = (e1 + e2
             + jnp.exp(s_aa - row_max).sum(axis=-1, keepdims=True)
             + jnp.exp(s_ab - row_max).sum(axis=-1, keepdims=True))
    p0 = e1 / denom                                            # exact divide (loss parity)

    logp = jnp.log(p0 + 1e-10) * valid                         # zero-out padded rows
    loss_ref[...] = -jnp.sum(logp, axis=0, keepdims=True)      # (1,1) sum; wrapper /B


def head_forward(o0, o1, o2, labels):
    B, H = o0.shape
    Bp = max(8, ((B + 7) // 8) * 8)                            # sublane-aligned row count
    pad = Bp - B
    pad_rows = lambda a: jnp.pad(a, ((0, pad), (0, 0)))
    o0p, o1p, o2p = pad_rows(o0), pad_rows(o1), pad_rows(o2)
    labp = jnp.pad(labels.astype(jnp.int32), (0, pad), constant_values=-1)[:, None]
    valid = (jnp.arange(Bp) < B).astype(jnp.float32)[:, None]

    vmem = pl.BlockSpec(memory_space=pltpu.MemorySpace.VMEM)
    loss_sum = pl.pallas_call(
        head_kernel,
        out_shape=jax.ShapeDtypeStruct((1, 1), jnp.float32),
        in_specs=[vmem, vmem, vmem, vmem, vmem],
        out_specs=vmem,
    )(o0p, o1p, o2p, labp, valid)
    return loss_sum[0, 0] / float(B)


# ----------------------------------------------------------------------------
# Full model wrapper (glue: embedding lookup, concat, bias precompute, split).
# ----------------------------------------------------------------------------
def clspooling_clone_detect_forward(params, input_ids, p_input_ids, n_input_ids, labels):
    bs, _ = input_ids.shape
    ids_all = jnp.concatenate([input_ids, p_input_ids, n_input_ids], axis=0)   # (3*bs, S)

    # attention_mask = input_ids.ne(1) -> precomputed additive key bias (3*bs, 1, S)
    key_bias = jnp.where(ids_all == 1, -1e9, 0.0).astype(jnp.float32)[:, None, :]

    # embedding (glue)
    x = (params["word_emb"][ids_all] + params["pos_emb"][None, :, :]).astype(jnp.float32)

    cls = encoder_forward(x, key_bias, params)                                  # (3*bs, H)
    o0 = cls[:bs]
    o1 = cls[bs:2 * bs]
    o2 = cls[2 * bs:]

    loss = head_forward(o0, o1, o2, labels)
    return loss, o0


# ----------------------------------------------------------------------------
# Deterministic parameter init + example run.
# ----------------------------------------------------------------------------
def init_params(key, vocab, seq, hidden, ffn):
    ks = jax.random.split(key, 8)
    nrm = lambda k, s: (0.02 * jax.random.normal(k, s)).astype(jnp.float32)
    return {
        "word_emb": nrm(ks[0], (vocab, hidden)),
        "pos_emb": nrm(ks[1], (seq, hidden)),
        "wq": nrm(ks[2], (hidden, hidden)).astype(jnp.bfloat16),
        "wkv": nrm(ks[3], (hidden, 2 * hidden)).astype(jnp.bfloat16),  # fused k|v
        "wo": nrm(ks[4], (hidden, hidden)).astype(jnp.bfloat16),
        "ln1_g": jnp.ones((1, hidden), jnp.float32),
        "ln1_b": jnp.zeros((1, hidden), jnp.float32),
        "w1": nrm(ks[5], (hidden, ffn)).astype(jnp.bfloat16),
        "b1": jnp.zeros((1, ffn), jnp.float32),
        "w2": nrm(ks[6], (ffn, hidden)).astype(jnp.bfloat16),
        "b2": jnp.zeros((1, hidden), jnp.float32),
        "ln2_g": jnp.ones((1, hidden), jnp.float32),
        "ln2_b": jnp.zeros((1, hidden), jnp.float32),
    }


if __name__ == "__main__":
    # Small, TPU-friendly shapes: hidden = 128 keeps all lane slices/tiles dense.
    B, S, H, FFN, V = 2, 8, 128, 256, 64

    root = jax.random.PRNGKey(0)
    k_par, k_a, k_p, k_n = jax.random.split(root, 4)

    params = init_params(k_par, V, S, H, FFN)

    # token ids in [2, V); position 0 is a CLS-like token; last two positions are pad (id 1).
    def make_ids(k):
        ids = jax.random.randint(k, (B, S), 2, V, dtype=jnp.int32)
        ids = ids.at[:, 0].set(0)
        ids = ids.at[:, -2:].set(1)
        return ids

    input_ids = make_ids(k_a)
    p_input_ids = make_ids(k_p)
    n_input_ids = make_ids(k_n)
    labels = jnp.array([0, 1], dtype=jnp.int32)

    fwd = jax.jit(clspooling_clone_detect_forward)
    loss, anchor_repr = fwd(params, input_ids, p_input_ids, n_input_ids, labels)

    jax.block_until_ready(loss)
    jax.block_until_ready(anchor_repr)

    assert anchor_repr.shape == (B, H)
    assert loss.shape == () and jnp.isfinite(loss)
    print("KERNEL_OK")
</pallas_src>

<mosaic_0001>
module attributes {stable_mosaic.version = 11 : i64} {
  func.func @encoder_layer_kernel(%arg0: i32, %arg1: memref<3x8x128xf32, #tpu.memory_space<vmem>>, %arg2: memref<3x1x8xf32, #tpu.memory_space<vmem>>, %arg3: memref<128x128xbf16, #tpu.memory_space<vmem>>, %arg4: memref<128x256xbf16, #tpu.memory_space<vmem>>, %arg5: memref<128x128xbf16, #tpu.memory_space<vmem>>, %arg6: memref<1x128xf32, #tpu.memory_space<vmem>>, %arg7: memref<1x128xf32, #tpu.memory_space<vmem>>, %arg8: memref<128x256xbf16, #tpu.memory_space<vmem>>, %arg9: memref<1x256xf32, #tpu.memory_space<vmem>>, %arg10: memref<256x128xbf16, #tpu.memory_space<vmem>>, %arg11: memref<1x128xf32, #tpu.memory_space<vmem>>, %arg12: memref<1x128xf32, #tpu.memory_space<vmem>>, %arg13: memref<1x128xf32, #tpu.memory_space<vmem>>, %arg14: memref<3x1x128xf32, #tpu.memory_space<vmem>>) attributes {dimension_semantics = [#tpu.dimension_semantics<parallel>], iteration_bounds = array<i64: 2>, scalar_prefetch = 0 : i64, scratch_operands = 0 : i64, tpu.core_type = #tpu.core_type<tc>, window_params = [{transform_indices = @transform_0, window_bounds = array<i64: 3, 8, 128>}, {transform_indices = @transform_1, window_bounds = array<i64: 3, 1, 8>}, {pipeline_mode = #tpu.pipeline_mode<synchronous>, transform_indices = @transform_2, window_bounds = array<i64: 128, 128>}, {pipeline_mode = #tpu.pipeline_mode<synchronous>, transform_indices = @transform_3, window_bounds = array<i64: 128, 256>}, {pipeline_mode = #tpu.pipeline_mode<synchronous>, transform_indices = @transform_4, window_bounds = array<i64: 128, 128>}, {pipeline_mode = #tpu.pipeline_mode<synchronous>, transform_indices = @transform_5, window_bounds = array<i64: 1, 128>}, {pipeline_mode = #tpu.pipeline_mode<synchronous>, transform_indices = @transform_6, window_bounds = array<i64: 1, 128>}, {pipeline_mode = #tpu.pipeline_mode<synchronous>, transform_indices = @transform_7, window_bounds = array<i64: 128, 256>}, {pipeline_mode = #tpu.pipeline_mode<synchronous>, transform_indices = @transform_8, window_bounds = array<i64: 1, 256>}, {pipeline_mode = #tpu.pipeline_mode<synchronous>, transform_indices = @transform_9, window_bounds = array<i64: 256, 128>}, {pipeline_mode = #tpu.pipeline_mode<synchronous>, transform_indices = @transform_10, window_bounds = array<i64: 1, 128>}, {pipeline_mode = #tpu.pipeline_mode<synchronous>, transform_indices = @transform_11, window_bounds = array<i64: 1, 128>}, {pipeline_mode = #tpu.pipeline_mode<synchronous>, transform_indices = @transform_12, window_bounds = array<i64: 1, 128>}, {transform_indices = @transform_13, window_bounds = array<i64: 3, 1, 128>}]} {
    %c0 = arith.constant 0 : index
    %c0_0 = arith.constant 0 : index
    %c0_1 = arith.constant 0 : index
    %0 = vector.load %arg1[%c0, %c0_0, %c0_1] : memref<3x8x128xf32, #tpu.memory_space<vmem>>, vector<3x8x128xf32>
    %1 = vector.shape_cast %0 : vector<3x8x128xf32> to vector<24x128xf32>
    %2 = arith.truncf %1 : vector<24x128xf32> to vector<24x128xbf16>
    %c0_2 = arith.constant 0 : index
    %c0_3 = arith.constant 0 : index
    %3 = vector.load %arg4[%c0_2, %c0_3] : memref<128x256xbf16, #tpu.memory_space<vmem>>, vector<128x256xbf16>
    %cst = arith.constant dense<0.000000e+00> : vector<24x256xf32>
    %4 = tpu.matmul %2, %3, %cst {dimension_numbers = #tpu.dot_dimension_numbers<[1], [0], [0], [1], [0, 0, 1, 1], [], []>} : vector<24x128xbf16>, vector<128x256xbf16>, vector<24x256xf32> -> vector<24x256xf32>
    %5 = vector.extract_strided_slice %4 {offsets = [0, 0], sizes = [24, 128], strides = [1, 1]} : vector<24x256xf32> to vector<24x128xf32>
    %6 = vector.shape_cast %5 : vector<24x128xf32> to vector<3x8x128xf32>
    %7 = vector.extract_strided_slice %4 {offsets = [0, 128], sizes = [24, 128], strides = [1, 1]} : vector<24x256xf32> to vector<24x128xf32>
    %8 = vector.shape_cast %7 : vector<24x128xf32> to vector<3x8x128xf32>
    %9 = vector.extract_strided_slice %0 {offsets = [0, 0, 0], sizes = [3, 1, 128], strides = [1, 1, 1]} : vector<3x8x128xf32> to vector<3x1x128xf32>
    %10 = vector.shape_cast %9 : vector<3x1x128xf32> to vector<3x128xf32>
    %11 = arith.truncf %10 : vector<3x128xf32> to vector<3x128xbf16>
    %c0_4 = arith.constant 0 : index
    %c0_5 = arith.constant 0 : index
    %12 = vector.load %arg3[%c0_4, %c0_5] : memref<128x128xbf16, #tpu.memory_space<vmem>>, vector<128x128xbf16>
    %cst_6 = arith.constant dense<0.000000e+00> : vector<3x128xf32>
    %13 = tpu.matmul %11, %12, %cst_6 {dimension_numbers = #tpu.dot_dimension_numbers<[1], [0], [0], [1], [0, 0, 1, 1], [], []>} : vector<3x128xbf16>, vector<128x128xbf16>, vector<3x128xf32> -> vector<3x128xf32>
    %14 = vector.shape_cast %13 : vector<3x128xf32> to vector<3x1x128xf32>
    %15 = arith.truncf %14 : vector<3x1x128xf32> to vector<3x1x128xbf16>
    %16 = arith.truncf %6 : vector<3x8x128xf32> to vector<3x8x128xbf16>
    "tpu.trace_start"() <{level = 10 : i32, message = "bqd,bkd->bqk"}> : () -> ()
    %cst_7 = arith.constant dense<0.000000e+00> : vector<3x1x8xf32>
    %17 = tpu.matmul %15, %16, %cst_7 {dimension_numbers = #tpu.dot_dimension_numbers<[2], [2], [1], [1], [0, 0, 0, 1, 1, 1], [0], [0]>} : vector<3x1x128xbf16>, vector<3x8x128xbf16>, vector<3x1x8xf32> -> vector<3x1x8xf32>
    "tpu.trace_stop"() : () -> ()
    %cst_8 = arith.constant 0.0883883461 : f32
    %18 = vector.broadcast %cst_8 : f32 to vector<3x1x8xf32>
    %19 = arith.mulf %17, %18 : vector<3x1x8xf32>
    %c0_9 = arith.constant 0 : index
    %c0_10 = arith.constant 0 : index
    %c0_11 = arith.constant 0 : index
    %20 = vector.load %arg2[%c0_9, %c0_10, %c0_11] : memref<3x1x8xf32, #tpu.memory_space<vmem>>, vector<3x1x8xf32>
    %21 = arith.addf %19, %20 : vector<3x1x8xf32>
    %cst_12 = arith.constant dense<0xFF800000> : vector<3x1xf32>
    %22 = vector.multi_reduction <maximumf>, %21, %cst_12 [2] : vector<3x1x8xf32> to vector<3x1xf32>
    %23 = vector.shape_cast %22 : vector<3x1xf32> to vector<3x1x1xf32>
    %24 = vector.broadcast %23 : vector<3x1x1xf32> to vector<3x1x8xf32>
    %25 = arith.subf %21, %24 : vector<3x1x8xf32>
    %26 = math.exp %25 : vector<3x1x8xf32>
    %cst_13 = arith.constant dense<0.000000e+00> : vector<3x1xf32>
    %27 = vector.multi_reduction <add>, %26, %cst_13 [2] : vector<3x1x8xf32> to vector<3x1xf32>
    %28 = vector.shape_cast %27 : vector<3x1xf32> to vector<3x1x1xf32>
    %29 = tpu.reciprocal %28 {approx = true} : vector<3x1x1xf32> -> vector<3x1x1xf32>
    %30 = vector.broadcast %29 : vector<3x1x1xf32> to vector<3x1x8xf32>
    %31 = arith.mulf %26, %30 : vector<3x1x8xf32>
    %32 = arith.truncf %31 : vector<3x1x8xf32> to vector<3x1x8xbf16>
    %33 = arith.truncf %8 : vector<3x8x128xf32> to vector<3x8x128xbf16>
    "tpu.trace_start"() <{level = 10 : i32, message = "bqk,bkd->bqd"}> : () -> ()
    %cst_14 = arith.constant dense<0.000000e+00> : vector<3x1x128xf32>
    %34 = tpu.matmul %32, %33, %cst_14 {dimension_numbers = #tpu.dot_dimension_numbers<[2], [1], [1], [2], [0, 0, 0, 1, 1, 2], [0], [0]>} : vector<3x1x8xbf16>, vector<3x8x128xbf16>, vector<3x1x128xf32> -> vector<3x1x128xf32>
    "tpu.trace_stop"() : () -> ()
    %35 = vector.shape_cast %34 : vector<3x1x128xf32> to vector<3x128xf32>
    %36 = arith.truncf %35 : vector<3x128xf32> to vector<3x128xbf16>
    %c0_15 = arith.constant 0 : index
    %c0_16 = arith.constant 0 : index
    %37 = vector.load %arg5[%c0_15, %c0_16] : memref<128x128xbf16, #tpu.memory_space<vmem>>, vector<128x128xbf16>
    %cst_17 = arith.constant dense<0.000000e+00> : vector<3x128xf32>
    %38 = tpu.matmul %36, %37, %cst_17 {dimension_numbers = #tpu.dot_dimension_numbers<[1], [0], [0], [1], [0, 0, 1, 1], [], []>} : vector<3x128xbf16>, vector<128x128xbf16>, vector<3x128xf32> -> vector<3x128xf32>
    %39 = arith.addf %10, %38 : vector<3x128xf32>
    %cst_18 = arith.constant dense<0.000000e+00> : vector<3xf32>
    %40 = vector.multi_reduction <add>, %39, %cst_18 [1] : vector<3x128xf32> to vector<3xf32>
    %41 = vector.shape_cast %40 : vector<3xf32> to vector<3x1xf32>
    %cst_19 = arith.constant 1.280000e+02 : f32
    %42 = vector.broadcast %cst_19 : f32 to vector<3x1xf32>
    %43 = arith.divf %41, %42 : vector<3x1xf32>
    %44 = vector.broadcast %43 : vector<3x1xf32> to vector<3x128xf32>
    %45 = arith.subf %39, %44 : vector<3x128xf32>
    %46 = arith.mulf %45, %45 : vector<3x128xf32>
    %cst_20 = arith.constant dense<0.000000e+00> : vector<3xf32>
    %47 = vector.multi_reduction <add>, %46, %cst_20 [1] : vector<3x128xf32> to vector<3xf32>
    %48 = vector.shape_cast %47 : vector<3xf32> to vector<3x1xf32>
    %cst_21 = arith.constant 1.280000e+02 : f32
    %49 = vector.broadcast %cst_21 : f32 to vector<3x1xf32>
    %50 = arith.divf %48, %49 : vector<3x1xf32>
    %51 = vector.broadcast %43 : vector<3x1xf32> to vector<3x128xf32>
    %52 = arith.subf %39, %51 : vector<3x128xf32>
    %cst_22 = arith.constant 9.99999974E-6 : f32
    %53 = vector.broadcast %cst_22 : f32 to vector<3x1xf32>
    %54 = arith.addf %50, %53 : vector<3x1xf32>
    %55 = math.rsqrt %54 : vector<3x1xf32>
    %56 = vector.broadcast %55 : vector<3x1xf32> to vector<3x128xf32>
    %57 = arith.mulf %52, %56 : vector<3x128xf32>
    %c0_23 = arith.constant 0 : index
    %c0_24 = arith.constant 0 : index
    %58 = vector.load %arg6[%c0_23, %c0_24] : memref<1x128xf32, #tpu.memory_space<vmem>>, vector<1x128xf32>
    %59 = vector.broadcast %58 : vector<1x128xf32> to vector<3x128xf32>
    %60 = arith.mulf %57, %59 : vector<3x128xf32>
    %c0_25 = arith.constant 0 : index
    %c0_26 = arith.constant 0 : index
    %61 = vector.load %arg7[%c0_25, %c0_26] : memref<1x128xf32, #tpu.memory_space<vmem>>, vector<1x128xf32>
    %62 = vector.broadcast %61 : vector<1x128xf32> to vector<3x128xf32>
    %63 = arith.addf %60, %62 : vector<3x128xf32>
    %64 = arith.truncf %63 : vector<3x128xf32> to vector<3x128xbf16>
    %c0_27 = arith.constant 0 : index
    %c0_28 = arith.constant 0 : index
    %65 = vector.load %arg8[%c0_27, %c0_28] : memref<128x256xbf16, #tpu.memory_space<vmem>>, vector<128x256xbf16>
    %cst_29 = arith.constant dense<0.000000e+00> : vector<3x256xf32>
    %66 = tpu.matmul %64, %65, %cst_29 {dimension_numbers = #tpu.dot_dimension_numbers<[1], [0], [0], [1], [0, 0, 1, 1], [], []>} : vector<3x128xbf16>, vector<128x256xbf16>, vector<3x256xf32> -> vector<3x256xf32>
    %c0_30 = arith.constant 0 : index
    %c0_31 = arith.constant 0 : index
    %67 = vector.load %arg9[%c0_30, %c0_31] : memref<1x256xf32, #tpu.memory_space<vmem>>, vector<1x256xf32>
    %68 = vector.broadcast %67 : vector<1x256xf32> to vector<3x256xf32>
    %69 = arith.addf %66, %68 : vector<3x256xf32>
    %70 = arith.mulf %69, %69 : vector<3x256xf32>
    %71 = arith.mulf %69, %70 : vector<3x256xf32>
    %cst_32 = arith.constant 4.471500e-02 : f32
    %72 = vector.broadcast %cst_32 : f32 to vector<3x256xf32>
    %73 = arith.mulf %72, %71 : vector<3x256xf32>
    %74 = arith.addf %69, %73 : vector<3x256xf32>
    %cst_33 = arith.constant 0.797884583 : f32
    %75 = vector.broadcast %cst_33 : f32 to vector<3x256xf32>
    %76 = arith.mulf %75, %74 : vector<3x256xf32>
    %77 = math.tanh %76 : vector<3x256xf32>
    %cst_34 = arith.constant 1.000000e+00 : f32
    %78 = vector.broadcast %cst_34 : f32 to vector<3x256xf32>
    %79 = arith.addf %78, %77 : vector<3x256xf32>
    %cst_35 = arith.constant 5.000000e-01 : f32
    %80 = vector.broadcast %cst_35 : f32 to vector<3x256xf32>
    %81 = arith.mulf %80, %79 : vector<3x256xf32>
    %82 = arith.mulf %69, %81 : vector<3x256xf32>
    %83 = arith.truncf %82 : vector<3x256xf32> to vector<3x256xbf16>
    %c0_36 = arith.constant 0 : index
    %c0_37 = arith.constant 0 : index
    %84 = vector.load %arg10[%c0_36, %c0_37] : memref<256x128xbf16, #tpu.memory_space<vmem>>, vector<256x128xbf16>
    %cst_38 = arith.constant dense<0.000000e+00> : vector<3x128xf32>
    %85 = tpu.matmul %83, %84, %cst_38 {dimension_numbers = #tpu.dot_dimension_numbers<[1], [0], [0], [1], [0, 0, 1, 1], [], []>} : vector<3x256xbf16>, vector<256x128xbf16>, vector<3x128xf32> -> vector<3x128xf32>
    %c0_39 = arith.constant 0 : index
    %c0_40 = arith.constant 0 : index
    %86 = vector.load %arg11[%c0_39, %c0_40] : memref<1x128xf32, #tpu.memory_space<vmem>>, vector<1x128xf32>
    %87 = vector.broadcast %86 : vector<1x128xf32> to vector<3x128xf32>
    %88 = arith.addf %85, %87 : vector<3x128xf32>
    %89 = arith.addf %63, %88 : vector<3x128xf32>
    %cst_41 = arith.constant dense<0.000000e+00> : vector<3xf32>
    %90 = vector.multi_reduction <add>, %89, %cst_41 [1] : vector<3x128xf32> to vector<3xf32>
    %91 = vector.shape_cast %90 : vector<3xf32> to vector<3x1xf32>
    %cst_42 = arith.constant 1.280000e+02 : f32
    %92 = vector.broadcast %cst_42 : f32 to vector<3x1xf32>
    %93 = arith.divf %91, %92 : vector<3x1xf32>
    %94 = vector.broadcast %93 : vector<3x1xf32> to vector<3x128xf32>
    %95 = arith.subf %89, %94 : vector<3x128xf32>
    %96 = arith.mulf %95, %95 : vector<3x128xf32>
    %cst_43 = arith.constant dense<0.000000e+00> : vector<3xf32>
    %97 = vector.multi_reduction <add>, %96, %cst_43 [1] : vector<3x128xf32> to vector<3xf32>
    %98 = vector.shape_cast %97 : vector<3xf32> to vector<3x1xf32>
    %cst_44 = arith.constant 1.280000e+02 : f32
    %99 = vector.broadcast %cst_44 : f32 to vector<3x1xf32>
    %100 = arith.divf %98, %99 : vector<3x1xf32>
    %101 = vector.broadcast %93 : vector<3x1xf32> to vector<3x128xf32>
    %102 = arith.subf %89, %101 : vector<3x128xf32>
    %cst_45 = arith.constant 9.99999974E-6 : f32
    %103 = vector.broadcast %cst_45 : f32 to vector<3x1xf32>
    %104 = arith.addf %100, %103 : vector<3x1xf32>
    %105 = math.rsqrt %104 : vector<3x1xf32>
    %106 = vector.broadcast %105 : vector<3x1xf32> to vector<3x128xf32>
    %107 = arith.mulf %102, %106 : vector<3x128xf32>
    %c0_46 = arith.constant 0 : index
    %c0_47 = arith.constant 0 : index
    %108 = vector.load %arg12[%c0_46, %c0_47] : memref<1x128xf32, #tpu.memory_space<vmem>>, vector<1x128xf32>
    %109 = vector.broadcast %108 : vector<1x128xf32> to vector<3x128xf32>
    %110 = arith.mulf %107, %109 : vector<3x128xf32>
    %c0_48 = arith.constant 0 : index
    %c0_49 = arith.constant 0 : index
    %111 = vector.load %arg13[%c0_48, %c0_49] : memref<1x128xf32, #tpu.memory_space<vmem>>, vector<1x128xf32>
    %112 = vector.broadcast %111 : vector<1x128xf32> to vector<3x128xf32>
    %113 = arith.addf %110, %112 : vector<3x128xf32>
    %114 = vector.shape_cast %113 : vector<3x128xf32> to vector<3x1x128xf32>
    %c0_50 = arith.constant 0 : index
    %c0_51 = arith.constant 0 : index
    %c0_52 = arith.constant 0 : index
    %115 = vector.load %arg14[%c0_50, %c0_51, %c0_52] : memref<3x1x128xf32, #tpu.memory_space<vmem>>, vector<3x1x128xf32>
    tpu.vector_store %arg14[%c0_50, %c0_51, %c0_52], %114 {strides = array<i32>} : memref<3x1x128xf32, #tpu.memory_space<vmem>>, vector<3x1x128xf32>,
    return
  }
  func.func @transform_0(%arg0: i32) -> (i32, i32, i32) {
    %c0_i32 = arith.constant 0 : i32
    %c0_i32_0 = arith.constant 0 : i32
    %c0_i32_1 = arith.constant 0 : i32
    return %arg0, %c0_i32, %c0_i32_0 : i32, i32, i32
  }
  func.func @transform_1(%arg0: i32) -> (i32, i32, i32) {
    %c0_i32 = arith.constant 0 : i32
    %c0_i32_0 = arith.constant 0 : i32
    %c0_i32_1 = arith.constant 0 : i32
    return %arg0, %c0_i32, %c0_i32_0 : i32, i32, i32
  }
  func.func @transform_2(%arg0: i32) -> (i32, i32) {
    %c0_i32 = arith.constant 0 : i32
    %c0_i32_0 = arith.constant 0 : i32
    %c0_i32_1 = arith.constant 0 : i32
    return %c0_i32, %c0_i32_0 : i32, i32
  }
  func.func @transform_3(%arg0: i32) -> (i32, i32) {
    %c0_i32 = arith.constant 0 : i32
    %c0_i32_0 = arith.constant 0 : i32
    %c0_i32_1 = arith.constant 0 : i32
    return %c0_i32, %c0_i32_0 : i32, i32
  }
  func.func @transform_4(%arg0: i32) -> (i32, i32) {
    %c0_i32 = arith.constant 0 : i32
    %c0_i32_0 = arith.constant 0 : i32
    %c0_i32_1 = arith.constant 0 : i32
    return %c0_i32, %c0_i32_0 : i32, i32
  }
  func.func @transform_5(%arg0: i32) -> (i32, i32) {
    %c0_i32 = arith.constant 0 : i32
    %c0_i32_0 = arith.constant 0 : i32
    %c0_i32_1 = arith.constant 0 : i32
    return %c0_i32, %c0_i32_0 : i32, i32
  }
  func.func @transform_6(%arg0: i32) -> (i32, i32) {
    %c0_i32 = arith.constant 0 : i32
    %c0_i32_0 = arith.constant 0 : i32
    %c0_i32_1 = arith.constant 0 : i32
    return %c0_i32, %c0_i32_0 : i32, i32
  }
  func.func @transform_7(%arg0: i32) -> (i32, i32) {
    %c0_i32 = arith.constant 0 : i32
    %c0_i32_0 = arith.constant 0 : i32
    %c0_i32_1 = arith.constant 0 : i32
    return %c0_i32, %c0_i32_0 : i32, i32
  }
  func.func @transform_8(%arg0: i32) -> (i32, i32) {
    %c0_i32 = arith.constant 0 : i32
    %c0_i32_0 = arith.constant 0 : i32
    %c0_i32_1 = arith.constant 0 : i32
    return %c0_i32, %c0_i32_0 : i32, i32
  }
  func.func @transform_9(%arg0: i32) -> (i32, i32) {
    %c0_i32 = arith.constant 0 : i32
    %c0_i32_0 = arith.constant 0 : i32
    %c0_i32_1 = arith.constant 0 : i32
    return %c0_i32, %c0_i32_0 : i32, i32
  }
  func.func @transform_10(%arg0: i32) -> (i32, i32) {
    %c0_i32 = arith.constant 0 : i32
    %c0_i32_0 = arith.constant 0 : i32
    %c0_i32_1 = arith.constant 0 : i32
    return %c0_i32, %c0_i32_0 : i32, i32
  }
  func.func @transform_11(%arg0: i32) -> (i32, i32) {
    %c0_i32 = arith.constant 0 : i32
    %c0_i32_0 = arith.constant 0 : i32
    %c0_i32_1 = arith.constant 0 : i32
    return %c0_i32, %c0_i32_0 : i32, i32
  }
  func.func @transform_12(%arg0: i32) -> (i32, i32) {
    %c0_i32 = arith.constant 0 : i32
    %c0_i32_0 = arith.constant 0 : i32
    %c0_i32_1 = arith.constant 0 : i32
    return %c0_i32, %c0_i32_0 : i32, i32
  }
  func.func @transform_13(%arg0: i32) -> (i32, i32, i32) {
    %c0_i32 = arith.constant 0 : i32
    %c0_i32_0 = arith.constant 0 : i32
    %c0_i32_1 = arith.constant 0 : i32
    return %arg0, %c0_i32, %c0_i32_0 : i32, i32, i32
  }
}

module attributes {stable_mosaic.version = 11 : i64} {
  func.func @head_kernel(%arg0: memref<8x128xf32, #tpu.memory_space<vmem>>, %arg1: memref<8x128xf32, #tpu.memory_space<vmem>>, %arg2: memref<8x128xf32, #tpu.memory_space<vmem>>, %arg3: memref<8x1xi32, #tpu.memory_space<vmem>>, %arg4: memref<8x1xf32, #tpu.memory_space<vmem>>, %arg5: memref<1x1xf32, #tpu.memory_space<vmem>>) attributes {dimension_semantics = [], scalar_prefetch = 0 : i64, scratch_operands = 0 : i64, tpu.core_type = #tpu.core_type<tc>} {
    %c0 = arith.constant 0 : index
    %c0_0 = arith.constant 0 : index
    %0 = vector.load %arg0[%c0, %c0_0] : memref<8x128xf32, #tpu.memory_space<vmem>>, vector<8x128xf32>
    %c0_1 = arith.constant 0 : index
    %c0_2 = arith.constant 0 : index
    %1 = vector.load %arg1[%c0_1, %c0_2] : memref<8x128xf32, #tpu.memory_space<vmem>>, vector<8x128xf32>
    %c0_3 = arith.constant 0 : index
    %c0_4 = arith.constant 0 : index
    %2 = vector.load %arg2[%c0_3, %c0_4] : memref<8x128xf32, #tpu.memory_space<vmem>>, vector<8x128xf32>
    %c0_5 = arith.constant 0 : index
    %c0_6 = arith.constant 0 : index
    %3 = vector.load %arg3[%c0_5, %c0_6] : memref<8x1xi32, #tpu.memory_space<vmem>>, vector<8x1xi32>
    %c0_7 = arith.constant 0 : index
    %c0_8 = arith.constant 0 : index
    %4 = vector.load %arg4[%c0_7, %c0_8] : memref<8x1xf32, #tpu.memory_space<vmem>>, vector<8x1xf32>
    %5 = arith.mulf %0, %1 : vector<8x128xf32>
    %cst = arith.constant dense<0.000000e+00> : vector<8xf32>
    %6 = vector.multi_reduction <add>, %5, %cst [1] : vector<8x128xf32> to vector<8xf32>
    %7 = vector.shape_cast %6 : vector<8xf32> to vector<8x1xf32>
    %cst_9 = arith.constant 2.000000e+01 : f32
    %8 = vector.broadcast %cst_9 : f32 to vector<8x1xf32>
    %9 = arith.mulf %7, %8 : vector<8x1xf32>
    %10 = arith.mulf %0, %2 : vector<8x128xf32>
    %cst_10 = arith.constant dense<0.000000e+00> : vector<8xf32>
    %11 = vector.multi_reduction <add>, %10, %cst_10 [1] : vector<8x128xf32> to vector<8xf32>
    %12 = vector.shape_cast %11 : vector<8xf32> to vector<8x1xf32>
    %cst_11 = arith.constant 2.000000e+01 : f32
    %13 = vector.broadcast %cst_11 : f32 to vector<8x1xf32>
    %14 = arith.mulf %12, %13 : vector<8x1xf32>
    %cst_12 = arith.constant dense<0.000000e+00> : vector<8x8xf32>
    %15 = tpu.matmul %0, %0, %cst_12 {dimension_numbers = #tpu.dot_dimension_numbers<[1], [1], [0], [0], [0, 0, 1, 0], [], []>} : vector<8x128xf32>, vector<8x128xf32>, vector<8x8xf32> -> vector<8x8xf32>
    %cst_13 = arith.constant 2.000000e+01 : f32
    %16 = vector.broadcast %cst_13 : f32 to vector<8x8xf32>
    %17 = arith.mulf %15, %16 : vector<8x8xf32>
    %cst_14 = arith.constant dense<0.000000e+00> : vector<8x8xf32>
    %18 = tpu.matmul %0, %1, %cst_14 {dimension_numbers = #tpu.dot_dimension_numbers<[1], [1], [0], [0], [0, 0, 1, 0], [], []>} : vector<8x128xf32>, vector<8x128xf32>, vector<8x8xf32> -> vector<8x8xf32>
    %cst_15 = arith.constant 2.000000e+01 : f32
    %19 = vector.broadcast %cst_15 : f32 to vector<8x8xf32>
    %20 = arith.mulf %18, %19 : vector<8x8xf32>
    %21 = tpu.transpose %3, [1, 0] : vector<8x1xi32> -> vector<1x8xi32>
    %22 = vector.broadcast %3 : vector<8x1xi32> to vector<8x8xi32>
    %23 = vector.broadcast %21 : vector<1x8xi32> to vector<8x8xi32>
    %24 = arith.cmpi eq, %22, %23 : vector<8x8xi32>
    %25 = arith.extui %24 : vector<8x8xi1> to vector<8x8xi32>
    %26 = arith.sitofp %25 : vector<8x8xi32> to vector<8x8xf32>
    %27 = tpu.transpose %4, [1, 0] : vector<8x1xf32> -> vector<1x8xf32>
    %cst_16 = arith.constant 1.000000e+00 : f32
    %28 = vector.broadcast %cst_16 : f32 to vector<1x8xf32>
    %29 = arith.subf %28, %27 : vector<1x8xf32>
    %30 = vector.broadcast %29 : vector<1x8xf32> to vector<8x8xf32>
    %31 = arith.maximumf %26, %30 : vector<8x8xf32>
    %cst_17 = arith.constant 1.000000e+00 : f32
    %32 = vector.broadcast %cst_17 : f32 to vector<8x8xf32>
    %33 = arith.subf %32, %31 : vector<8x8xf32>
    %34 = arith.mulf %17, %33 : vector<8x8xf32>
    %cst_18 = arith.constant 1.000000e+09 : f32
    %35 = vector.broadcast %cst_18 : f32 to vector<8x8xf32>
    %36 = arith.mulf %35, %31 : vector<8x8xf32>
    %37 = arith.subf %34, %36 : vector<8x8xf32>
    %cst_19 = arith.constant 1.000000e+00 : f32
    %38 = vector.broadcast %cst_19 : f32 to vector<8x8xf32>
    %39 = arith.subf %38, %31 : vector<8x8xf32>
    %40 = arith.mulf %20, %39 : vector<8x8xf32>
    %cst_20 = arith.constant 1.000000e+09 : f32
    %41 = vector.broadcast %cst_20 : f32 to vector<8x8xf32>
    %42 = arith.mulf %41, %31 : vector<8x8xf32>
    %43 = arith.subf %40, %42 : vector<8x8xf32>
    %44 = arith.maximumf %9, %14 : vector<8x1xf32>
    %cst_21 = arith.constant dense<0xFF800000> : vector<8xf32>
    %45 = vector.multi_reduction <maximumf>, %37, %cst_21 [1] : vector<8x8xf32> to vector<8xf32>
    %46 = vector.shape_cast %45 : vector<8xf32> to vector<8x1xf32>
    %cst_22 = arith.constant dense<0xFF800000> : vector<8xf32>
    %47 = vector.multi_reduction <maximumf>, %43, %cst_22 [1] : vector<8x8xf32> to vector<8xf32>
    %48 = vector.shape_cast %47 : vector<8xf32> to vector<8x1xf32>
    %49 = arith.maximumf %46, %48 : vector<8x1xf32>
    %50 = arith.maximumf %44, %49 : vector<8x1xf32>
    %51 = arith.subf %9, %50 : vector<8x1xf32>
    %52 = math.exp %51 : vector<8x1xf32>
    %53 = arith.subf %14, %50 : vector<8x1xf32>
    %54 = math.exp %53 : vector<8x1xf32>
    %55 = arith.addf %52, %54 : vector<8x1xf32>
    %56 = vector.broadcast %50 : vector<8x1xf32> to vector<8x8xf32>
    %57 = arith.subf %37, %56 : vector<8x8xf32>
    %58 = math.exp %57 : vector<8x8xf32>
    %cst_23 = arith.constant dense<0.000000e+00> : vector<8xf32>
    %59 = vector.multi_reduction <add>, %58, %cst_23 [1] : vector<8x8xf32> to vector<8xf32>
    %60 = vector.shape_cast %59 : vector<8xf32> to vector<8x1xf32>
    %61 = arith.addf %55, %60 : vector<8x1xf32>
    %62 = vector.broadcast %50 : vector<8x1xf32> to vector<8x8xf32>
    %63 = arith.subf %43, %62 : vector<8x8xf32>
    %64 = math.exp %63 : vector<8x8xf32>
    %cst_24 = arith.constant dense<0.000000e+00> : vector<8xf32>
    %65 = vector.multi_reduction <add>, %64, %cst_24 [1] : vector<8x8xf32> to vector<8xf32>
    %66 = vector.shape_cast %65 : vector<8xf32> to vector<8x1xf32>
    %67 = arith.addf %61, %66 : vector<8x1xf32>
    %68 = arith.divf %52, %67 : vector<8x1xf32>
    %cst_25 = arith.constant 1.000000e-10 : f32
    %69 = vector.broadcast %cst_25 : f32 to vector<8x1xf32>
    %70 = arith.addf %68, %69 : vector<8x1xf32>
    %71 = math.log %70 : vector<8x1xf32>
    %72 = arith.mulf %71, %4 : vector<8x1xf32>
    %cst_26 = arith.constant dense<0.000000e+00> : vector<1xf32>
    %73 = vector.multi_reduction <add>, %72, %cst_26 [0] : vector<8x1xf32> to vector<1xf32>
    %74 = vector.shape_cast %73 : vector<1xf32> to vector<1x1xf32>
    %cst_27 = arith.constant 0.000000e+00 : f32
    %75 = vector.broadcast %cst_27 : f32 to vector<1x1xf32>
    %76 = arith.subf %75, %74 : vector<1x1xf32>
    %c0_28 = arith.constant 0 : index
    %c0_29 = arith.constant 0 : index
    %77 = vector.load %arg5[%c0_28, %c0_29] : memref<1x1xf32, #tpu.memory_space<vmem>>, vector<1x1xf32>
    tpu.vector_store %arg5[%c0_28, %c0_29], %76 {strides = array<i32>} : memref<1x1xf32, #tpu.memory_space<vmem>>, vector<1x1xf32>,
    return
  }
}

</mosaic_0001>

<llo_original>
// kernel: clspooling_clone_detect_forward.3
$region0: #{clspooling_clone_detect_forward.3}
  #allocation0 [shape = 'u32[]', space=smem, size = 0x4, offset = 0x4, fixed_abs, tag = 'smem constant byte address 0x4 - core index']
  #allocation1 [shape = 'u32[72,128]{1,0:T(1,128)}', space=vmem, size = 0x9000, scoped, tag = 'internal scratch']
  %s0 = inlined_call_operand.vmem [shape: f32[8,128], index: 0, kind: input, shape index: {}]
  %s1 = inlined_call_operand.vmem [shape: f32[8,128], index: 1, kind: input, shape index: {}]
  %s2 = inlined_call_operand.vmem [shape: f32[8,128], index: 2, kind: input, shape index: {}]
  %s3 = inlined_call_operand.vmem [shape: s32[8,1], index: 3, kind: input, shape index: {}]
  %s4 = inlined_call_operand.vmem [shape: f32[8,1], index: 4, kind: input, shape index: {}]
  %s5 = inlined_call_operand.hbm [shape: f32[1,1], index: 5, kind: output, shape index: {}]
  %s6 = sld [smem:[#allocation0]]
  $region30: #{clspooling_clone_detect_forward.3} parent=0
    _
  %s8 = ssub.s32 1, %s6
  %s9 = scalar_select 0, %s8, %s6
  $region1: #{clspooling_clone_detect_forward.3} parent=0
    #allocation2 [shape = 'u8[512]{0}', space=vmem, size = 0x400, scoped, tag = 'output window, operand 0, single buffered']
    #allocation3 [shape = 's32[1]{0}', space=sflag, size = 0x4, scoped, tag = 'scoped memory for clspooling_clone_detect_forward.3']
    %10 = vsyncpa [#allocation3], 0
    // Predicated region
    $region2: #{clspooling_clone_detect_forward.3} parent=1 // pred_check
      _
    $region3: #{clspooling_clone_detect_forward.3} parent=1 // pred_check_branch
      %12 = sbr.rel (0) target = $region5
    $region4: #{clspooling_clone_detect_forward.3} parent=1 // pred_region
      _
    $region5: #{clspooling_clone_detect_forward.3} parent=1 // pred_fallthru
      _
    // Predicated region
    $region6: #{clspooling_clone_detect_forward.3} parent=1 // pred_check
      _
    $region7: #{clspooling_clone_detect_forward.3} parent=1 // pred_check_branch
      %14 = sbr.rel (0) target = $region9
    $region8: #{clspooling_clone_detect_forward.3} parent=1 // pred_region
      _
    $region9: #{clspooling_clone_detect_forward.3} parent=1 // pred_fallthru
      _
    // Predicated region
    $region10: #{clspooling_clone_detect_forward.3} parent=1 // pred_check
      _
    $region11: #{clspooling_clone_detect_forward.3} parent=1 // pred_check_branch
      %16 = sbr.rel (0) target = $region13
    $region12: #{clspooling_clone_detect_forward.3} parent=1 // pred_region
      _
    $region13: #{clspooling_clone_detect_forward.3} parent=1 // pred_fallthru
      _
    // Predicated region
    $region14: #{clspooling_clone_detect_forward.3} parent=1 // pred_check
      _
    $region15: #{clspooling_clone_detect_forward.3} parent=1 // pred_check_branch
      %18 = sbr.rel (0) target = $region17
    $region16: #{clspooling_clone_detect_forward.3} parent=1 // pred_region
      _
    $region17: #{clspooling_clone_detect_forward.3} parent=1 // pred_fallthru
      _
    // Predicated region
    $region18: #{clspooling_clone_detect_forward.3} parent=1 // pred_check
      _
    $region19: #{clspooling_clone_detect_forward.3} parent=1 // pred_check_branch
      %20 = sbr.rel (0) target = $region21
    $region20: #{clspooling_clone_detect_forward.3} parent=1 // pred_region
      _
    $region21: #{clspooling_clone_detect_forward.3} parent=1 // pred_fallthru
      _
    %v21 = vld [vmem:[%s0] sm:$0xff]
    %v22 = vld [vmem:[%s1] sm:$0xff]
    %v23 = vld [vmem:[%s2] sm:$0xff]
    %v24 = vld [vmem:[%s3] sm:$0xff]
    %v25 = vld [vmem:[%s4] sm:$0xff]
    %v26 = vmul.f32 %v21, %v22
    %27 = vadd.xlane.f32.xlu0 %v26
    %v28 = vpop.xlane.xlu0 %27
    %v29 = vmul.f32 %v28, 20.0
    %v30 = vmul.f32 %v21, %v23
    %31 = vadd.xlane.f32.xlu0 %v30
    %v32 = vpop.xlane.xlu0 %31
    %v33 = vmul.f32 %v32, 20.0
    %34 = vmatpush.xpose.msra.mxu0 0.0
    %35 = vmatpush.xpose.msra.mxu0 0.0
    %36 = vmatpush.xpose.msra.mxu0 0.0
    %37 = vmatpush.xpose.msra.mxu0 0.0
    %38 = vmatpush.xpose.msra.mxu0 0.0
    %39 = vmatpush.xpose.msra.mxu0 0.0
    %40 = vmatpush.xpose.msra.mxu0 0.0
    %41 = vmatpush.xpose.msra.mxu0 0.0
    %42 = vmatpush.xpose.msra.mxu0 0.0
    %43 = vmatpush.xpose.msra.mxu0 0.0
    %44 = vmatpush.xpose.msra.mxu0 0.0
    %45 = vmatpush.xpose.msra.mxu0 0.0
    %46 = vmatpush.xpose.msra.mxu0 0.0
    %47 = vmatpush.xpose.msra.mxu0 0.0
    %48 = vmatpush.xpose.msra.mxu0 0.0
    %49 = vmatpush.xpose.msra.mxu0 %v21
    %50 = vmatmul.f32.gmra.mxu0 %v21
    %v51 = vpop.f32.mrf.mxu0
    %v52 = vadd.f32 0.0, %v51
    %53 = vdwg.mxu0
    %v54 = vmul.f32 %v52, 20.0
    %55 = vmatpush.xpose.msra.mxu0 0.0
    %56 = vmatpush.xpose.msra.mxu0 0.0
    %57 = vmatpush.xpose.msra.mxu0 0.0
    %58 = vmatpush.xpose.msra.mxu0 0.0
    %59 = vmatpush.xpose.msra.mxu0 0.0
    %60 = vmatpush.xpose.msra.mxu0 0.0
    %61 = vmatpush.xpose.msra.mxu0 0.0
    %62 = vmatpush.xpose.msra.mxu0 0.0
    %63 = vmatpush.xpose.msra.mxu0 0.0
    %64 = vmatpush.xpose.msra.mxu0 0.0
    %65 = vmatpush.xpose.msra.mxu0 0.0
    %66 = vmatpush.xpose.msra.mxu0 0.0
    %67 = vmatpush.xpose.msra.mxu0 0.0
    %68 = vmatpush.xpose.msra.mxu0 0.0
    %69 = vmatpush.xpose.msra.mxu0 0.0
    %70 = vmatpush.xpose.msra.mxu0 %v22
    %71 = vmatmul.f32.gmra.mxu0 %v21
    %v72 = vpop.f32.mrf.mxu0
    %v73 = vadd.f32 0.0, %v72
    %74 = vdwg.mxu0
    %v75 = vmul.f32 %v73, 20.0
    %76 = vxpose.xlu0.b32.start [1/16] %v24, 128
    %77 = vxpose.xlu0.b32.cont [2/16] 0, 128
    %78 = vxpose.xlu0.b32.cont [3/16] 0, 128
    %79 = vxpose.xlu0.b32.cont [4/16] 0, 128
    %80 = vxpose.xlu0.b32.cont [5/16] 0, 128
    %81 = vxpose.xlu0.b32.cont [6/16] 0, 128
    %82 = vxpose.xlu0.b32.cont [7/16] 0, 128
    %83 = vxpose.xlu0.b32.cont [8/16] 0, 128
    %84 = vxpose.xlu0.b32.cont [9/16] 0, 128
    %85 = vxpose.xlu0.b32.cont [10/16] 0, 128
    %86 = vxpose.xlu0.b32.cont [11/16] 0, 128
    %87 = vxpose.xlu0.b32.cont [12/16] 0, 128
    %88 = vxpose.xlu0.b32.cont [13/16] 0, 128
    %89 = vxpose.xlu0.b32.cont [14/16] 0, 128
    %90 = vxpose.xlu0.b32.cont [15/16] 0, 128
    %91 = vxpose.xlu0.b32.end [16/16] 0, 128
    %v92 = vpop.trf.xlu0
    %v93 = vpop.trf.xlu0
    %v94 = vpop.trf.xlu0
    %v95 = vpop.trf.xlu0
    %v96 = vpop.trf.xlu0
    %v97 = vpop.trf.xlu0
    %v98 = vpop.trf.xlu0
    %v99 = vpop.trf.xlu0
    %v100 = vpop.trf.xlu0
    %v101 = vpop.trf.xlu0
    %v102 = vpop.trf.xlu0
    %v103 = vpop.trf.xlu0
    %v104 = vpop.trf.xlu0
    %v105 = vpop.trf.xlu0
    %v106 = vpop.trf.xlu0
    %v107 = vpop.trf.xlu0
    %108 = vset.pattern.permute.xlu0 0
    %109 = vperm.xlu0 %108, %v24
    %v110 = vpop.permute.xlu0 %109
    %v111 = vperm.slane %v92, 0
    %vm112 = vcmp.eq.s32.totalorder %v110, %v111
    %v113 = vsel %vm112, 1, 0
    %v114 = vcvt.s32.f32 %v113
    %115 = vxpose.xlu0.b32.start [1/16] %v25, 128
    %116 = vxpose.xlu0.b32.cont [2/16] 0.0, 128
    %117 = vxpose.xlu0.b32.cont [3/16] 0.0, 128
    %118 = vxpose.xlu0.b32.cont [4/16] 0.0, 128
    %119 = vxpose.xlu0.b32.cont [5/16] 0.0, 128
    %120 = vxpose.xlu0.b32.cont [6/16] 0.0, 128
    %121 = vxpose.xlu0.b32.cont [7/16] 0.0, 128
    %122 = vxpose.xlu0.b32.cont [8/16] 0.0, 128
    %123 = vxpose.xlu0.b32.cont [9/16] 0.0, 128
    %124 = vxpose.xlu0.b32.cont [10/16] 0.0, 128
    %125 = vxpose.xlu0.b32.cont [11/16] 0.0, 128
    %126 = vxpose.xlu0.b32.cont [12/16] 0.0, 128
    %127 = vxpose.xlu0.b32.cont [13/16] 0.0, 128
    %128 = vxpose.xlu0.b32.cont [14/16] 0.0, 128
    %129 = vxpose.xlu0.b32.cont [15/16] 0.0, 128
    %130 = vxpose.xlu0.b32.end [16/16] 0.0, 128
    %v131 = vpop.trf.xlu0
    %v132 = vpop.trf.xlu0
    %v133 = vpop.trf.xlu0
    %v134 = vpop.trf.xlu0
    %v135 = vpop.trf.xlu0
    %v136 = vpop.trf.xlu0
    %v137 = vpop.trf.xlu0
    %v138 = vpop.trf.xlu0
    %v139 = vpop.trf.xlu0
    %v140 = vpop.trf.xlu0
    %v141 = vpop.trf.xlu0
    %v142 = vpop.trf.xlu0
    %v143 = vpop.trf.xlu0
    %v144 = vpop.trf.xlu0
    %v145 = vpop.trf.xlu0
    %v146 = vpop.trf.xlu0
    %v147 = vsub.f32 1.0, %v131
    %v148 = vperm.slane %v147, 0
    %v149 = vmax.f32 %v114, %v148
    %v150 = vsub.f32 1.0, %v149
    %v151 = vmul.f32 %v54, %v150
    %v152 = vmul.f32 %v149, 1e+09
    %v153 = vsub.f32 %v151, %v152
    %v154 = vmul.f32 %v75, %v150
    %v155 = vsub.f32 %v154, %v152
    %v156 = vmax.f32 %v29, %v33
    %vm157 = vcmask 64512
    %v158 = vsel %vm157, %v153, -inf
    %159 = vmax.xlane.f32.xlu0 %v158
    %v160 = vpop.xlane.xlu0 %159
    %v161 = vsel %vm157, %v155, -inf
    %162 = vmax.xlane.f32.xlu0 %v161
    %v163 = vpop.xlane.xlu0 %162
    %v164 = vmax.f32 %v160, %v163
    %v165 = vmax.f32 %v156, %v164
    %v166 = vsub.f32 %v29, %v165
    %v167 = vmul.f32 %v166, 1.442695
    %v168 = vpow.pop %v167
    %v169 = vsub.f32 %v33, %v165
    %v170 = vmul.f32 %v169, 1.442695
    %v171 = vpow.pop %v170
    %v172 = vadd.f32 %v168, %v171
    %v173 = vsub.f32 %v153, %v165
    %v174 = vmul.f32 %v173, 1.442695
    %v175 = vpow.pop %v174
    %v176 = vsel %vm157, %v175, 0.0
    %177 = vadd.xlane.f32.xlu0 %v176
    %v178 = vpop.xlane.xlu0 %177
    %v179 = vadd.f32 %v172, %v178
    %v180 = vsub.f32 %v155, %v165
    %v181 = vmul.f32 %v180, 1.442695
    %v182 = vpow.pop %v181
    %v183 = vsel %vm157, %v182, 0.0
    %184 = vadd.xlane.f32.xlu0 %v183
    %v185 = vpop.xlane.xlu0 %184
    %v186 = vadd.f32 %v179, %v185
    %v187 = vrcp.pop %v186
    %v188 = vmul.f32 %v186, %v187
    %v189 = vsub.f32 1.0, %v188
    %v190 = vmul.f32 %v187, %v189
    %v191 = vadd.f32 %v187, %v190
    %vm192 = vweird.f32 %v186
    %vm193 = vweird.f32 %v187
    %vm194 = vmor %vm192, %vm193
    %v195 = vsel %vm194, %v187, %v191
    %v196 = vand.u32 2147483647, %v186
    %vm197 = vcmp.eq.f32.partialorder %v196, 8.507059e+37
    %v198 = vand.u32 %v186, 2147483648
    %v199 = vor.u32 1.1754944e-38, %v198
    %v200 = vsel %vm197, %v199, %v195
    %v201 = vmul.f32 %v168, %v200
    %v202 = vadd.f32 %v201, 1e-10
    %v203 = vlog2.pop %v202
    %v204 = vmul.f32 %v203, 0.6931472
    %v205 = vmul.f32 %v204, %v25
    %vm206 = vcmask 7168
    %v207 = vsel %vm206, %v205, 0.0
    %v208 = vrot.slane %v207, 4
    %v209 = vadd.f32 %v207, %v208
    %v210 = vrot.slane %v209, 2
    %v211 = vadd.f32 %v209, %v210
    %v212 = vrot.slane %v211, 1
    %v213 = vadd.f32 %v211, %v212
    %v214 = vsub.f32 0.0, %v213
    %vm215 = vcmask 0
    %216 = vst.msk [vmem:[#allocation2] sm:$0x1] %vm215, %v214
    // Predicated region
    $region22: #{clspooling_clone_detect_forward.3} parent=1 // pred_check
      _
    $region23: #{clspooling_clone_detect_forward.3} parent=1 // pred_check_branch
      %218 = sbr.rel (0) target = $region25
    $region24: #{clspooling_clone_detect_forward.3} parent=1 // pred_region
      %220 = vsyncadd [#allocation3], 0
      %s222 = sshll.u32 [#allocation2], 4
      %s223 = int_to_ptr.vmem [resolvable:$true] %s222
      %s224 = sshll.u32 %s5, 4
      %s225 = int_to_ptr.hbm [resolvable:$true] %s224
      %227 = dma.vmem_to_hbm [thread:$0]  %s223, 16, %s225, [#allocation3]
    $region25: #{clspooling_clone_detect_forward.3} parent=1 // pred_fallthru
      _
    // Predicated region
    $region26: #{clspooling_clone_detect_forward.3} parent=1 // pred_check
      _
    $region27: #{clspooling_clone_detect_forward.3} parent=1 // pred_check_branch
      %229 = sbr.rel (0) target = $region29
    $region28: #{clspooling_clone_detect_forward.3} parent=1 // pred_region
      %231 = dma.done [#allocation3], 16
    $region29: #{clspooling_clone_detect_forward.3} parent=1 // pred_fallthru
      _
    %232 = vsyncpa [#allocation3], 1

// kernel: clspooling_clone_detect_forward.2
$region0: #{clspooling_clone_detect_forward.2}
  #allocation0 [shape = 'u32[]', space=smem, size = 0x4, offset = 0x4, fixed_abs, tag = 'smem constant byte address 0x4 - core index']
  #allocation1 [shape = 'u32[72,128]{1,0:T(1,128)}', space=vmem, size = 0x9000, scoped, tag = 'internal scratch']
  %s0 = inlined_call_operand.vmem [shape: f32[6,8,128], index: 0, kind: input, shape index: {}]
  %s1 = inlined_call_operand.vmem [shape: f32[6,1,8], index: 1, kind: input, shape index: {}]
  %s2 = inlined_call_operand.vmem [shape: bf16[128,128], index: 2, kind: input, shape index: {}]
  %s3 = inlined_call_operand.vmem [shape: bf16[128,256], index: 3, kind: input, shape index: {}]
  %s4 = inlined_call_operand.vmem [shape: bf16[128,128], index: 4, kind: input, shape index: {}]
  %s5 = inlined_call_operand.vmem [shape: f32[1,128], index: 5, kind: input, shape index: {}]
  %s6 = inlined_call_operand.vmem [shape: f32[1,128], index: 6, kind: input, shape index: {}]
  %s7 = inlined_call_operand.vmem [shape: bf16[128,256], index: 7, kind: input, shape index: {}]
  %s8 = inlined_call_operand.vmem [shape: f32[1,256], index: 8, kind: input, shape index: {}]
  %s9 = inlined_call_operand.vmem [shape: bf16[256,128], index: 9, kind: input, shape index: {}]
  %s10 = inlined_call_operand.vmem [shape: f32[1,128], index: 10, kind: input, shape index: {}]
  %s11 = inlined_call_operand.vmem [shape: f32[1,128], index: 11, kind: input, shape index: {}]
  %s12 = inlined_call_operand.vmem [shape: f32[1,128], index: 12, kind: input, shape index: {}]
  %s13 = inlined_call_operand.vmem [shape: f32[6,1,128], index: 13, kind: output, shape index: {}]
  %s14 = sld [smem:[#allocation0]]
  $region85: #{clspooling_clone_detect_forward.2} parent=0
    _
  %s16 = ssub.s32 1, %s14
  %s17 = scalar_select 0, %s16, %s14
  loop: start=0, step=1, limit=4
  $region2: #{clspooling_clone_detect_forward.2} parent=0 // loop_pre_header
    _
  $region3: #{clspooling_clone_detect_forward.2} parent=0 // loop_header
    %s19 = sphi 0, %s23
    %p20 = scmp.ge.s32.totalorder %s19, 4
    %s29 = sphi 0, %s31
    %s32 = sphi 0, %s29
    %s33 = sphi 0, %s32
    %s49 = sphi 0, %s33
    %s55 = sphi 0, %s57
    %s58 = sphi 0, %s55
    %s59 = sphi 0, %s58
    %s75 = sphi 0, %s59
    %s79 = sphi 0, %s79
    %s81 = sphi 0, %s79
    %s82 = sphi 0, %s81
    %s96 = sphi 0, %s82
    %s100 = sphi 0, %s100
    %s102 = sphi 0, %s100
    %s103 = sphi 0, %s102
    %s117 = sphi 0, %s103
    %s121 = sphi 0, %s121
    %s123 = sphi 0, %s121
    %s124 = sphi 0, %s123
    %s138 = sphi 0, %s124
    %s142 = sphi 0, %s142
    %s144 = sphi 0, %s142
    %s145 = sphi 0, %s144
    %s159 = sphi 0, %s145
    %s163 = sphi 0, %s163
    %s165 = sphi 0, %s163
    %s166 = sphi 0, %s165
    %s180 = sphi 0, %s166
    %s184 = sphi 0, %s184
    %s186 = sphi 0, %s184
    %s187 = sphi 0, %s186
    %s201 = sphi 0, %s187
    %s205 = sphi 0, %s205
    %s207 = sphi 0, %s205
    %s208 = sphi 0, %s207
    %s222 = sphi 0, %s208
    %s226 = sphi 0, %s226
    %s228 = sphi 0, %s226
    %s229 = sphi 0, %s228
    %s243 = sphi 0, %s229
    %s247 = sphi 0, %s247
    %s249 = sphi 0, %s247
    %s250 = sphi 0, %s249
    %s264 = sphi 0, %s250
    %s268 = sphi 0, %s268
    %s270 = sphi 0, %s268
    %s271 = sphi 0, %s270
    %s285 = sphi 0, %s271
    %s289 = sphi 0, %s289
    %s291 = sphi 0, %s289
    %s292 = sphi 0, %s291
    %s306 = sphi 0, %s292
    %s312 = sphi 0, %s314
    %s315 = sphi 0, %s312
    %s316 = sphi 0, %s315
    %s332 = sphi 0, %s316
  $region4: #{clspooling_clone_detect_forward.2} parent=0 // loop_header_branch
    %22 = sbr.rel (%p20) target = $region8
  $region5: #{clspooling_clone_detect_forward.2} parent=0 // loop_body
    %s24 = ssub.s32 %s19, 1
    %s25 = ssub.s32 %s19, 2
    %s26 = sadd.s32 %s19, 1
    %s27 = ssub.s32 %s19, %s26
    %p28 = scmp.eq.s32.totalorder %s27, 0
    %s30 = sadd.s32 %s29, 1
    %s31 = scalar_select %p28, %s29, %s30
    %p34 = pneg %p28
    %p35 = scmp.eq.s32.totalorder %s19, 1
    %p36 = por %p34, %p35
    %p37 = scmp.ne.s32.totalorder %s29, %s32
    %p38 = scmp.eq.s32.totalorder %s19, 0
    %p39 = por %p37, %p38
    %p40 = scmp.ne.s32.totalorder %s29, %s32
    %p41 = scmp.eq.s32.totalorder %s24, 1
    %p42 = por %p40, %p41
    %p43 = scmp.ne.s32.totalorder %s32, %s33
    %p44 = scmp.eq.s32.totalorder %s24, 0
    %p45 = por %p43, %p44
    %p46 = scmp.ne.s32.totalorder %s32, %s33
    %p47 = scmp.eq.s32.totalorder %s25, 1
    %p48 = por %p46, %p47
    %p50 = scmp.ne.s32.totalorder %s33, %s49
    %p51 = scmp.eq.s32.totalorder %s25, 0
    %p52 = por %p50, %p51
    %s53 = ssub.s32 %s19, %s26
    %p54 = scmp.eq.s32.totalorder %s53, 0
    %s56 = sadd.s32 %s55, 1
    %s57 = scalar_select %p54, %s55, %s56
    %p60 = pneg %p54
    %p61 = scmp.eq.s32.totalorder %s19, 1
    %p62 = por %p60, %p61
    %p63 = scmp.ne.s32.totalorder %s55, %s58
    %p64 = scmp.eq.s32.totalorder %s19, 0
    %p65 = por %p63, %p64
    %p66 = scmp.ne.s32.totalorder %s55, %s58
    %p67 = scmp.eq.s32.totalorder %s24, 1
    %p68 = por %p66, %p67
    %p69 = scmp.ne.s32.totalorder %s58, %s59
    %p70 = scmp.eq.s32.totalorder %s24, 0
    %p71 = por %p69, %p70
    %p72 = scmp.ne.s32.totalorder %s58, %s59
    %p73 = scmp.eq.s32.totalorder %s25, 1
    %p74 = por %p72, %p73
    %p76 = scmp.ne.s32.totalorder %s59, %s75
    %p77 = scmp.eq.s32.totalorder %s25, 0
    %p78 = por %p76, %p77
    %s80 = sadd.s32 %s79, 1
    %p83 = scmp.eq.s32.totalorder %s19, 1
    %p84 = scmp.ne.s32.totalorder %s79, %s81
    %p85 = scmp.eq.s32.totalorder %s19, 0
    %p86 = por %p84, %p85
    %p87 = scmp.ne.s32.totalorder %s79, %s81
    %p88 = scmp.eq.s32.totalorder %s24, 1
    %p89 = por %p87, %p88
    %p90 = scmp.ne.s32.totalorder %s81, %s82
    %p91 = scmp.eq.s32.totalorder %s24, 0
    %p92 = por %p90, %p91
    %p93 = scmp.ne.s32.totalorder %s81, %s82
    %p94 = scmp.eq.s32.totalorder %s25, 1
    %p95 = por %p93, %p94
    %p97 = scmp.ne.s32.totalorder %s82, %s96
    %p98 = scmp.eq.s32.totalorder %s25, 0
    %p99 = por %p97, %p98
    %s101 = sadd.s32 %s100, 1
    %p104 = scmp.eq.s32.totalorder %s19, 1
    %p105 = scmp.ne.s32.totalorder %s100, %s102
    %p106 = scmp.eq.s32.totalorder %s19, 0
    %p107 = por %p105, %p106
    %p108 = scmp.ne.s32.totalorder %s100, %s102
    %p109 = scmp.eq.s32.totalorder %s24, 1
    %p110 = por %p108, %p109
    %p111 = scmp.ne.s32.totalorder %s102, %s103
    %p112 = scmp.eq.s32.totalorder %s24, 0
    %p113 = por %p111, %p112
    %p114 = scmp.ne.s32.totalorder %s102, %s103
    %p115 = scmp.eq.s32.totalorder %s25, 1
    %p116 = por %p114, %p115
    %p118 = scmp.ne.s32.totalorder %s103, %s117
    %p119 = scmp.eq.s32.totalorder %s25, 0
    %p120 = por %p118, %p119
    %s122 = sadd.s32 %s121, 1
    %p125 = scmp.eq.s32.totalorder %s19, 1
    %p126 = scmp.ne.s32.totalorder %s121, %s123
    %p127 = scmp.eq.s32.totalorder %s19, 0
    %p128 = por %p126, %p127
    %p129 = scmp.ne.s32.totalorder %s121, %s123
    %p130 = scmp.eq.s32.totalorder %s24, 1
    %p131 = por %p129, %p130
    %p132 = scmp.ne.s32.totalorder %s123, %s124
    %p133 = scmp.eq.s32.totalorder %s24, 0
    %p134 = por %p132, %p133
    %p135 = scmp.ne.s32.totalorder %s123, %s124
    %p136 = scmp.eq.s32.totalorder %s25, 1
    %p137 = por %p135, %p136
    %p139 = scmp.ne.s32.totalorder %s124, %s138
    %p140 = scmp.eq.s32.totalorder %s25, 0
    %p141 = por %p139, %p140
    %s143 = sadd.s32 %s142, 1
    %p146 = scmp.eq.s32.totalorder %s19, 1
    %p147 = scmp.ne.s32.totalorder %s142, %s144
    %p148 = scmp.eq.s32.totalorder %s19, 0
    %p149 = por %p147, %p148
    %p150 = scmp.ne.s32.totalorder %s142, %s144
    %p151 = scmp.eq.s32.totalorder %s24, 1
    %p152 = por %p150, %p151
    %p153 = scmp.ne.s32.totalorder %s144, %s145
    %p154 = scmp.eq.s32.totalorder %s24, 0
    %p155 = por %p153, %p154
    %p156 = scmp.ne.s32.totalorder %s144, %s145
    %p157 = scmp.eq.s32.totalorder %s25, 1
    %p158 = por %p156, %p157
    %p160 = scmp.ne.s32.totalorder %s145, %s159
    %p161 = scmp.eq.s32.totalorder %s25, 0
    %p162 = por %p160, %p161
    %s164 = sadd.s32 %s163, 1
    %p167 = scmp.eq.s32.totalorder %s19, 1
    %p168 = scmp.ne.s32.totalorder %s163, %s165
    %p169 = scmp.eq.s32.totalorder %s19, 0
    %p170 = por %p168, %p169
    %p171 = scmp.ne.s32.totalorder %s163, %s165
    %p172 = scmp.eq.s32.totalorder %s24, 1
    %p173 = por %p171, %p172
    %p174 = scmp.ne.s32.totalorder %s165, %s166
    %p175 = scmp.eq.s32.totalorder %s24, 0
    %p176 = por %p174, %p175
    %p177 = scmp.ne.s32.totalorder %s165, %s166
    %p178 = scmp.eq.s32.totalorder %s25, 1
    %p179 = por %p177, %p178
    %p181 = scmp.ne.s32.totalorder %s166, %s180
    %p182 = scmp.eq.s32.totalorder %s25, 0
    %p183 = por %p181, %p182
    %s185 = sadd.s32 %s184, 1
    %p188 = scmp.eq.s32.totalorder %s19, 1
    %p189 = scmp.ne.s32.totalorder %s184, %s186
    %p190 = scmp.eq.s32.totalorder %s19, 0
    %p191 = por %p189, %p190
    %p192 = scmp.ne.s32.totalorder %s184, %s186
    %p193 = scmp.eq.s32.totalorder %s24, 1
    %p194 = por %p192, %p193
    %p195 = scmp.ne.s32.totalorder %s186, %s187
    %p196 = scmp.eq.s32.totalorder %s24, 0
    %p197 = por %p195, %p196
    %p198 = scmp.ne.s32.totalorder %s186, %s187
    %p199 = scmp.eq.s32.totalorder %s25, 1
    %p200 = por %p198, %p199
    %p202 = scmp.ne.s32.totalorder %s187, %s201
    %p203 = scmp.eq.s32.totalorder %s25, 0
    %p204 = por %p202, %p203
    %s206 = sadd.s32 %s205, 1
    %p209 = scmp.eq.s32.totalorder %s19, 1
    %p210 = scmp.ne.s32.totalorder %s205, %s207
    %p211 = scmp.eq.s32.totalorder %s19, 0
    %p212 = por %p210, %p211
    %p213 = scmp.ne.s32.totalorder %s205, %s207
    %p214 = scmp.eq.s32.totalorder %s24, 1
    %p215 = por %p213, %p214
    %p216 = scmp.ne.s32.totalorder %s207, %s208
    %p217 = scmp.eq.s32.totalorder %s24, 0
    %p218 = por %p216, %p217
    %p219 = scmp.ne.s32.totalorder %s207, %s208
    %p220 = scmp.eq.s32.totalorder %s25, 1
    %p221 = por %p219, %p220
    %p223 = scmp.ne.s32.totalorder %s208, %s222
    %p224 = scmp.eq.s32.totalorder %s25, 0
    %p225 = por %p223, %p224
    %s227 = sadd.s32 %s226, 1
    %p230 = scmp.eq.s32.totalorder %s19, 1
    %p231 = scmp.ne.s32.totalorder %s226, %s228
    %p232 = scmp.eq.s32.totalorder %s19, 0
    %p233 = por %p231, %p232
    %p234 = scmp.ne.s32.totalorder %s226, %s228
    %p235 = scmp.eq.s32.totalorder %s24, 1
    %p236 = por %p234, %p235
    %p237 = scmp.ne.s32.totalorder %s228, %s229
    %p238 = scmp.eq.s32.totalorder %s24, 0
    %p239 = por %p237, %p238
    %p240 = scmp.ne.s32.totalorder %s228, %s229
    %p241 = scmp.eq.s32.totalorder %s25, 1
    %p242 = por %p240, %p241
    %p244 = scmp.ne.s32.totalorder %s229, %s243
    %p245 = scmp.eq.s32.totalorder %s25, 0
    %p246 = por %p244, %p245
    %s248 = sadd.s32 %s247, 1
    %p251 = scmp.eq.s32.totalorder %s19, 1
    %p252 = scmp.ne.s32.totalorder %s247, %s249
    %p253 = scmp.eq.s32.totalorder %s19, 0
    %p254 = por %p252, %p253
    %p255 = scmp.ne.s32.totalorder %s247, %s249
    %p256 = scmp.eq.s32.totalorder %s24, 1
    %p257 = por %p255, %p256
    %p258 = scmp.ne.s32.totalorder %s249, %s250
    %p259 = scmp.eq.s32.totalorder %s24, 0
    %p260 = por %p258, %p259
    %p261 = scmp.ne.s32.totalorder %s249, %s250
    %p262 = scmp.eq.s32.totalorder %s25, 1
    %p263 = por %p261, %p262
    %p265 = scmp.ne.s32.totalorder %s250, %s264
    %p266 = scmp.eq.s32.totalorder %s25, 0
    %p267 = por %p265, %p266
    %s269 = sadd.s32 %s268, 1
    %p272 = scmp.eq.s32.totalorder %s19, 1
    %p273 = scmp.ne.s32.totalorder %s268, %s270
    %p274 = scmp.eq.s32.totalorder %s19, 0
    %p275 = por %p273, %p274
    %p276 = scmp.ne.s32.totalorder %s268, %s270
    %p277 = scmp.eq.s32.totalorder %s24, 1
    %p278 = por %p276, %p277
    %p279 = scmp.ne.s32.totalorder %s270, %s271
    %p280 = scmp.eq.s32.totalorder %s24, 0
    %p281 = por %p279, %p280
    %p282 = scmp.ne.s32.totalorder %s270, %s271
    %p283 = scmp.eq.s32.totalorder %s25, 1
    %p284 = por %p282, %p283
    %p286 = scmp.ne.s32.totalorder %s271, %s285
    %p287 = scmp.eq.s32.totalorder %s25, 0
    %p288 = por %p286, %p287
    %s290 = sadd.s32 %s289, 1
    %p293 = scmp.eq.s32.totalorder %s19, 1
    %p294 = scmp.ne.s32.totalorder %s289, %s291
    %p295 = scmp.eq.s32.totalorder %s19, 0
    %p296 = por %p294, %p295
    %p297 = scmp.ne.s32.totalorder %s289, %s291
    %p298 = scmp.eq.s32.totalorder %s24, 1
    %p299 = por %p297, %p298
    %p300 = scmp.ne.s32.totalorder %s291, %s292
    %p301 = scmp.eq.s32.totalorder %s24, 0
    %p302 = por %p300, %p301
    %p303 = scmp.ne.s32.totalorder %s291, %s292
    %p304 = scmp.eq.s32.totalorder %s25, 1
    %p305 = por %p303, %p304
    %p307 = scmp.ne.s32.totalorder %s292, %s306
    %p308 = scmp.eq.s32.totalorder %s25, 0
    %p309 = por %p307, %p308
    %s310 = ssub.s32 %s19, %s26
    %p311 = scmp.eq.s32.totalorder %s310, 0
    %s313 = sadd.s32 %s312, 1
    %s314 = scalar_select %p311, %s312, %s313
    %p317 = pneg %p311
    %p318 = scmp.eq.s32.totalorder %s19, 1
    %p319 = por %p317, %p318
    %p320 = scmp.ne.s32.totalorder %s312, %s315
    %p321 = scmp.eq.s32.totalorder %s19, 0
    %p322 = por %p320, %p321
    %p323 = scmp.ne.s32.totalorder %s312, %s315
    %p324 = scmp.eq.s32.totalorder %s24, 1
    %p325 = por %p323, %p324
    %p326 = scmp.ne.s32.totalorder %s315, %s316
    %p327 = scmp.eq.s32.totalorder %s24, 0
    %p328 = por %p326, %p327
    %p329 = scmp.ne.s32.totalorder %s315, %s316
    %p330 = scmp.eq.s32.totalorder %s25, 1
    %p331 = por %p329, %p330
    %p333 = scmp.ne.s32.totalorder %s316, %s332
    %p334 = scmp.eq.s32.totalorder %s25, 0
    %p335 = por %p333, %p334
    %p336 = scmp.le.s32.totalorder 1, %s19
    %p337 = scmp.lt.s32.totalorder %s19, 3
    %p338 = pnand %p336, %p337
    %p339 = pneg %p338
    // Predicated region
    $region9: #{clspooling_clone_detect_forward.2} parent=5 // pred_check
      _
    $region10: #{clspooling_clone_detect_forward.2} parent=5 // pred_check_branch
      %341 = sbr.rel (%p338) target = $region12
    $region11: #{clspooling_clone_detect_forward.2} parent=5 // pred_region
      %s342 = ssub.s32 %s19, 1
      // Predicated region
      $region13: #{clspooling_clone_detect_forward.2} parent=11 // pred_check
        %p343 = pneg %p92
      $region14: #{clspooling_clone_detect_forward.2} parent=11 // pred_check_branch
        %345 = sbr.rel (%p343) target = $region16
      $region15: #{clspooling_clone_detect_forward.2} parent=11 // pred_region
        _
      $region16: #{clspooling_clone_detect_forward.2} parent=11 // pred_fallthru
        _
      // Predicated region
      $region17: #{clspooling_clone_detect_forward.2} parent=11 // pred_check
        %p346 = pneg %p113
      $region18: #{clspooling_clone_detect_forward.2} parent=11 // pred_check_branch
        %348 = sbr.rel (%p346) target = $region20
      $region19: #{clspooling_clone_detect_forward.2} parent=11 // pred_region
        _
      $region20: #{clspooling_clone_detect_forward.2} parent=11 // pred_fallthru
        _
      // Predicated region
      $region21: #{clspooling_clone_detect_forward.2} parent=11 // pred_check
        %p349 = pneg %p134
      $region22: #{clspooling_clone_detect_forward.2} parent=11 // pred_check_branch
        %351 = sbr.rel (%p349) target = $region24
      $region23: #{clspooling_clone_detect_forward.2} parent=11 // pred_region
        _
      $region24: #{clspooling_clone_detect_forward.2} parent=11 // pred_fallthru
        _
      // Predicated region
      $region25: #{clspooling_clone_detect_forward.2} parent=11 // pred_check
        %p352 = pneg %p155
      $region26: #{clspooling_clone_detect_forward.2} parent=11 // pred_check_branch
        %354 = sbr.rel (%p352) target = $region28
      $region27: #{clspooling_clone_detect_forward.2} parent=11 // pred_region
        _
      $region28: #{clspooling_clone_detect_forward.2} parent=11 // pred_fallthru
        _
      // Predicated region
      $region29: #{clspooling_clone_detect_forward.2} parent=11 // pred_check
        %p355 = pneg %p176
      $region30: #{clspooling_clone_detect_forward.2} parent=11 // pred_check_branch
        %357 = sbr.rel (%p355) target = $region32
      $region31: #{clspooling_clone_detect_forward.2} parent=11 // pred_region
        _
      $region32: #{clspooling_clone_detect_forward.2} parent=11 // pred_fallthru
        _
      // Predicated region
      $region33: #{clspooling_clone_detect_forward.2} parent=11 // pred_check
        %p358 = pneg %p197
      $region34: #{clspooling_clone_detect_forward.2} parent=11 // pred_check_branch
        %360 = sbr.rel (%p358) target = $region36
      $region35: #{clspooling_clone_detect_forward.2} parent=11 // pred_region
        _
      $region36: #{clspooling_clone_detect_forward.2} parent=11 // pred_fallthru
        _
      // Predicated region
      $region37: #{clspooling_clone_detect_forward.2} parent=11 // pred_check
        %p361 = pneg %p218
      $region38: #{clspooling_clone_detect_forward.2} parent=11 // pred_check_branch
        %363 = sbr.rel (%p361) target = $region40
      $region39: #{clspooling_clone_detect_forward.2} parent=11 // pred_region
        _
      $region40: #{clspooling_clone_detect_forward.2} parent=11 // pred_fallthru
        _
      // Predicated region
      $region41: #{clspooling_clone_detect_forward.2} parent=11 // pred_check
        %p364 = pneg %p239
      $region42: #{clspooling_clone_detect_forward.2} parent=11 // pred_check_branch
        %366 = sbr.rel (%p364) target = $region44
      $region43: #{clspooling_clone_detect_forward.2} parent=11 // pred_region
        _
      $region44: #{clspooling_clone_detect_forward.2} parent=11 // pred_fallthru
        _
      // Predicated region
      $region45: #{clspooling_clone_detect_forward.2} parent=11 // pred_check
        %p367 = pneg %p260
      $region46: #{clspooling_clone_detect_forward.2} parent=11 // pred_check_branch
        %369 = sbr.rel (%p367) target = $region48
      $region47: #{clspooling_clone_detect_forward.2} parent=11 // pred_region
        _
      $region48: #{clspooling_clone_detect_forward.2} parent=11 // pred_fallthru
        _
      // Predicated region
      $region49: #{clspooling_clone_detect_forward.2} parent=11 // pred_check
        %p370 = pneg %p281
      $region50: #{clspooling_clone_detect_forward.2} parent=11 // pred_check_branch
        %372 = sbr.rel (%p370) target = $region52
      $region51: #{clspooling_clone_detect_forward.2} parent=11 // pred_region
        _
      $region52: #{clspooling_clone_detect_forward.2} parent=11 // pred_fallthru
        _
      // Predicated region
      $region53: #{clspooling_clone_detect_forward.2} parent=11 // pred_check
        %p373 = pneg %p302
      $region54: #{clspooling_clone_detect_forward.2} parent=11 // pred_check_branch
        %375 = sbr.rel (%p373) target = $region56
      $region55: #{clspooling_clone_detect_forward.2} parent=11 // pred_region
        _
      $region56: #{clspooling_clone_detect_forward.2} parent=11 // pred_fallthru
        _
    $region12: #{clspooling_clone_detect_forward.2} parent=5 // pred_fallthru
      _
    %p376 = scmp.lt.s32.totalorder %s19, 2
    // Predicated region
    $region57: #{clspooling_clone_detect_forward.2} parent=5 // pred_check
      %p377 = pneg %p376
    $region58: #{clspooling_clone_detect_forward.2} parent=5 // pred_check_branch
      %379 = sbr.rel (%p377) target = $region60
    $region59: #{clspooling_clone_detect_forward.2} parent=5 // pred_region
      // Predicated region
      $region61: #{clspooling_clone_detect_forward.2} parent=59 // pred_check
        %p380 = pneg %p39
      $region62: #{clspooling_clone_detect_forward.2} parent=59 // pred_check_branch
        %382 = sbr.rel (%p380) target = $region64
      $region63: #{clspooling_clone_detect_forward.2} parent=59 // pred_region
        %s383 = smul.u32 3, %s19
        %p384 = scmp.lt.s32.totalorder %s383, 5
        %s385 = scalar_select %p384, %s383, 5
        %s386 = smul.addr %s385, 8
        %s387 = scalar_lea.vmem %s0, %s386
        %s388 = smul.u32 3, %s19
      $region64: #{clspooling_clone_detect_forward.2} parent=59 // pred_fallthru
        _
      // Predicated region
      $region65: #{clspooling_clone_detect_forward.2} parent=59 // pred_check
        %p389 = pneg %p65
      $region66: #{clspooling_clone_detect_forward.2} parent=59 // pred_check_branch
        %391 = sbr.rel (%p389) target = $region68
      $region67: #{clspooling_clone_detect_forward.2} parent=59 // pred_region
        %s392 = smul.u32 3, %s19
        %p393 = scmp.lt.s32.totalorder %s392, 5
        %s394 = scalar_select %p393, %s392, 5
        %s395 = scalar_lea.vmem %s1, %s394
        %s396 = smul.u32 3, %s19
      $region68: #{clspooling_clone_detect_forward.2} parent=59 // pred_fallthru
        _
    $region60: #{clspooling_clone_detect_forward.2} parent=5 // pred_fallthru
      _
    %p397 = scmp.le.s32.totalorder 1, %s19
    %p398 = scmp.lt.s32.totalorder %s19, 3
    %p399 = pnand %p397, %p398
    %p400 = pneg %p399
    // Predicated region
    $region69: #{clspooling_clone_detect_forward.2} parent=5 // pred_check
      _
    $region70: #{clspooling_clone_detect_forward.2} parent=5 // pred_check_branch
      %402 = sbr.rel (%p399) target = $region72
    $region71: #{clspooling_clone_detect_forward.2} parent=5 // pred_region
      %s403 = ssub.s32 %s19, 1
      %s404 = smul.u32 3, %s24
      %p405 = scmp.lt.s32.totalorder %s404, 5
      %s406 = scalar_select %p405, %s404, 5
      %s407 = smul.addr %s406, 8
      %s408 = scalar_lea.vmem %s0, %s407
      %p409 = pneg %p45
      %p410 = pneg %p42
      %s411 = smul.u32 3, %s24
      %p412 = scmp.lt.s32.totalorder %s411, 5
      %s413 = scalar_select %p412, %s411, 5
      %s414 = scalar_lea.vmem %s1, %s413
      %p415 = pneg %p71
      %p416 = pneg %p68
      %p417 = pneg %p92
      %p418 = pneg %p89
      %p419 = pneg %p113
      %p420 = pneg %p110
      %p421 = pneg %p134
      %p422 = pneg %p131
      %p423 = pneg %p155
      %p424 = pneg %p152
      %p425 = pneg %p176
      %p426 = pneg %p173
      %p427 = pneg %p197
      %p428 = pneg %p194
      %p429 = pneg %p218
      %p430 = pneg %p215
      %p431 = pneg %p239
      %p432 = pneg %p236
      %p433 = pneg %p260
      %p434 = pneg %p257
      %p435 = pneg %p281
      %p436 = pneg %p278
      %p437 = pneg %p302
      %p438 = pneg %p299
      %p439 = pneg %p328
      %p440 = pneg %p325
      %s441 = smul.u32 3, %s24
      %p442 = scmp.lt.s32.totalorder %s441, 5
      %s443 = scalar_select %p442, %s441, 5
      %s444 = scalar_lea.vmem %s13, %s443
      %s445 = smul.u32 3, %s24
      %p446 = scmp.lt.s32.totalorder %s445, 5
      %s447 = scalar_select %p446, %s445, 5
      %s448 = smul.addr %s447, 8
      %s449 = scalar_lea.vmem %s0, %s448
      %s450 = smul.u32 3, %s24
      %s451 = smul.u32 3, %s24
      %p452 = scmp.lt.s32.totalorder %s451, 5
      %s453 = scalar_select %p452, %s451, 5
      %s454 = scalar_lea.vmem %s1, %s453
      %s455 = smul.u32 3, %s24
      %s456 = smul.u32 3, %s24
      %p457 = scmp.lt.s32.totalorder %s456, 5
      %s458 = scalar_select %p457, %s456, 5
      %s459 = scalar_lea.vmem %s13, %s458
      %s460 = smul.u32 3, %s24
      %v462 = vld [vmem:[%s449] sm:$0xff]
      %v463 = vld [vmem:[%s449 + $0x8] sm:$0xff]
      %v464 = vld [vmem:[%s449 + $0x10] sm:$0xff]
      %v465 = vpack.c.bf16 %v463, %v462
      %v466 = vpack.c.bf16 %v464, %v464
      %v467 = vld [vmem:[%s3] sm:$0xff]
      %v468 = vld [vmem:[%s3 + $0x8] sm:$0xff]
      %v469 = vld [vmem:[%s3 + $0x10] sm:$0xff]
      %v470 = vld [vmem:[%s3 + $0x18] sm:$0xff]
      %v471 = vld [vmem:[%s3 + $0x20] sm:$0xff]
      %v472 = vld [vmem:[%s3 + $0x28] sm:$0xff]
      %v473 = vld [vmem:[%s3 + $0x30] sm:$0xff]
      %v474 = vld [vmem:[%s3 + $0x38] sm:$0xff]
      %v475 = vld [vmem:[%s3 + $0x40] sm:$0xff]
      %v476 = vld [vmem:[%s3 + $0x48] sm:$0xff]
      %v477 = vld [vmem:[%s3 + $0x50] sm:$0xff]
      %v478 = vld [vmem:[%s3 + $0x58] sm:$0xff]
      %v479 = vld [vmem:[%s3 + $0x60] sm:$0xff]
      %v480 = vld [vmem:[%s3 + $0x68] sm:$0xff]
      %v481 = vld [vmem:[%s3 + $0x70] sm:$0xff]
      %v482 = vld [vmem:[%s3 + $0x78] sm:$0xff]
      %v499 = vunpack.c.l.b16 %v467
      %v500 = vunpack.c.h.b16 %v467
      %v501 = vunpack.c.l.b16 %v468
      %v502 = vunpack.c.h.b16 %v468
      %v503 = vunpack.c.l.b16 %v469
      %v504 = vunpack.c.h.b16 %v469
      %v505 = vunpack.c.l.b16 %v470
      %v506 = vunpack.c.h.b16 %v470
      %v507 = vunpack.c.l.b16 %v471
      %v508 = vunpack.c.h.b16 %v471
      %v509 = vunpack.c.l.b16 %v472
      %v510 = vunpack.c.h.b16 %v472
      %v511 = vunpack.c.l.b16 %v473
      %v512 = vunpack.c.h.b16 %v473
      %v513 = vunpack.c.l.b16 %v474
      %v514 = vunpack.c.h.b16 %v474
      %v515 = vunpack.c.l.b16 %v475
      %v516 = vunpack.c.h.b16 %v475
      %v517 = vunpack.c.l.b16 %v476
      %v518 = vunpack.c.h.b16 %v476
      %v519 = vunpack.c.l.b16 %v477
      %v520 = vunpack.c.h.b16 %v477
      %v521 = vunpack.c.l.b16 %v478
      %v522 = vunpack.c.h.b16 %v478
      %v523 = vunpack.c.l.b16 %v479
      %v524 = vunpack.c.h.b16 %v479
      %v525 = vunpack.c.l.b16 %v480
      %v526 = vunpack.c.h.b16 %v480
      %v527 = vunpack.c.l.b16 %v481
      %v528 = vunpack.c.h.b16 %v481
      %v529 = vunpack.c.l.b16 %v482
      %v530 = vunpack.c.h.b16 %v482
      %v531 = vpack.c.b16 %v501, %v499
      %v532 = vpack.c.b16 %v502, %v500
      %v533 = vpack.c.b16 %v505, %v503
      %v534 = vpack.c.b16 %v506, %v504
      %v535 = vpack.c.b16 %v509, %v507
      %v536 = vpack.c.b16 %v510, %v508
      %v537 = vpack.c.b16 %v513, %v511
      %v538 = vpack.c.b16 %v514, %v512
      %v539 = vpack.c.b16 %v517, %v515
      %v540 = vpack.c.b16 %v518, %v516
      %v541 = vpack.c.b16 %v521, %v519
      %v542 = vpack.c.b16 %v522, %v520
      %v543 = vpack.c.b16 %v525, %v523
      %v544 = vpack.c.b16 %v526, %v524
      %v545 = vpack.c.b16 %v529, %v527
      %v546 = vpack.c.b16 %v530, %v528
      %563 = vmatpush.bf16.msra.mxu0 %v545
      %564 = vmatpush.bf16.msra.mxu0 %v543
      %565 = vmatpush.bf16.msra.mxu0 %v541
      %566 = vmatpush.bf16.msra.mxu0 %v539
      %567 = vmatpush.bf16.msra.mxu0 %v537
      %568 = vmatpush.bf16.msra.mxu0 %v535
      %569 = vmatpush.bf16.msra.mxu0 %v533
      %570 = vmatpush.bf16.msra.mxu0 %v531
      %571 = vmatmul.bf16.gmra.mxu0 %v465
      %v572 = vpop.f32.mrf.mxu0
      %v573 = vadd.f32 0.0, %v572
      %v574 = vpop.f32.mrf.mxu0
      %v575 = vadd.f32 0.0, %v574
      %576 = vmatmul.bf16.gmra.mxu0 %v466
      %v577 = vpop.f32.mrf.mxu0
      %v578 = vadd.f32 0.0, %v577
      %v579 = vpop.f32.mrf.mxu0
      %580 = vdwg.mxu0
      %581 = vmatpush.bf16.msra.mxu0 %v546
      %582 = vmatpush.bf16.msra.mxu0 %v544
      %583 = vmatpush.bf16.msra.mxu0 %v542
      %584 = vmatpush.bf16.msra.mxu0 %v540
      %585 = vmatpush.bf16.msra.mxu0 %v538
      %586 = vmatpush.bf16.msra.mxu0 %v536
      %587 = vmatpush.bf16.msra.mxu0 %v534
      %588 = vmatpush.bf16.msra.mxu0 %v532
      %589 = vmatmul.bf16.gmra.mxu0 %v465
      %v590 = vpop.f32.mrf.mxu0
      %v591 = vadd.f32 0.0, %v590
      %v592 = vpop.f32.mrf.mxu0
      %v593 = vadd.f32 0.0, %v592
      %594 = vmatmul.bf16.gmra.mxu0 %v466
      %v595 = vpop.f32.mrf.mxu0
      %v596 = vadd.f32 0.0, %v595
      %v597 = vpop.f32.mrf.mxu0
      %598 = vdwg.mxu0
      %v599 = vpack.c.bf16 %v462, %v462
      %v600 = vpack.c.bf16 %v463, %v463
      %v601 = vld [vmem:[%s2] sm:$0xf]
      %v602 = vld [vmem:[%s2 + $0x4] sm:$0xf]
      %v603 = vld [vmem:[%s2 + $0x8] sm:$0xf]
      %v604 = vld [vmem:[%s2 + $0xc] sm:$0xf]
      %v605 = vld [vmem:[%s2 + $0x10] sm:$0xf]
      %v606 = vld [vmem:[%s2 + $0x14] sm:$0xf]
      %v607 = vld [vmem:[%s2 + $0x18] sm:$0xf]
      %v608 = vld [vmem:[%s2 + $0x1c] sm:$0xf]
      %v609 = vld [vmem:[%s2 + $0x20] sm:$0xf]
      %v610 = vld [vmem:[%s2 + $0x24] sm:$0xf]
      %v611 = vld [vmem:[%s2 + $0x28] sm:$0xf]
      %v612 = vld [vmem:[%s2 + $0x2c] sm:$0xf]
      %v613 = vld [vmem:[%s2 + $0x30] sm:$0xf]
      %v614 = vld [vmem:[%s2 + $0x34] sm:$0xf]
      %v615 = vld [vmem:[%s2 + $0x38] sm:$0xf]
      %v616 = vld [vmem:[%s2 + $0x3c] sm:$0xf]
      %v620 = vunpack.c.l.b16 %v599
      %v621 = vunpack.c.l.b16 %v600
      %v622 = vunpack.c.l.b16 %v466
      %v623 = vrot.slane %v621, 7
      %vm624 = vcmask 1041409
      %v625 = vsel %vm624, %v623, %v620
      %v626 = vrot.slane %v622, 6
      %vm627 = vcmask 1042434
      %v628 = vsel %vm627, %v626, %v625
      %v629 = vpack.c.b16 %v628, %v628
      %v647 = vunpack.c.l.b16 %v601
      %v648 = vunpack.c.l.b16 %v602
      %v649 = vunpack.c.l.b16 %v603
      %v650 = vunpack.c.l.b16 %v604
      %v651 = vunpack.c.l.b16 %v605
      %v652 = vunpack.c.l.b16 %v606
      %v653 = vunpack.c.l.b16 %v607
      %v654 = vunpack.c.l.b16 %v608
      %v655 = vunpack.c.l.b16 %v609
      %v656 = vunpack.c.l.b16 %v610
      %v657 = vunpack.c.l.b16 %v611
      %v658 = vunpack.c.l.b16 %v612
      %v659 = vunpack.c.l.b16 %v613
      %v660 = vunpack.c.l.b16 %v614
      %v661 = vunpack.c.l.b16 %v615
      %v662 = vunpack.c.l.b16 %v616
      %v663 = vpack.c.b16 %v648, %v647
      %v664 = vpack.c.b16 %v650, %v649
      %v665 = vpack.c.b16 %v652, %v651
      %v666 = vpack.c.b16 %v654, %v653
      %v667 = vpack.c.b16 %v656, %v655
      %v668 = vpack.c.b16 %v658, %v657
      %v669 = vpack.c.b16 %v660, %v659
      %v670 = vpack.c.b16 %v662, %v661
      %679 = vmatpush.bf16.msra.mxu0 %v670
      %680 = vmatpush.bf16.msra.mxu0 %v669
      %681 = vmatpush.bf16.msra.mxu0 %v668
      %682 = vmatpush.bf16.msra.mxu0 %v667
      %683 = vmatpush.bf16.msra.mxu0 %v666
      %684 = vmatpush.bf16.msra.mxu0 %v665
      %685 = vmatpush.bf16.msra.mxu0 %v664
      %686 = vmatpush.bf16.msra.mxu0 %v663
      %687 = vmatmul.bf16.gmra.mxu0 %v629
      %v688 = vpop.f32.mrf.mxu0
      %v689 = vadd.f32 0.0, %v688
      %v690 = vpop.f32.mrf.mxu0
      %691 = vdwg.mxu0
      %v693 = vrot.slane %v689, 1
      %v694 = vrot.slane %v689, 2
      %v697 = vpack.c.bf16 %v689, %v689
      %v698 = vpack.c.bf16 %v693, %v693
      %v699 = vpack.c.bf16 %v694, %v694
      %v700 = vpack.c.bf16 %v573, %v573
      %v701 = vpack.c.bf16 %v575, %v575
      %v702 = vpack.c.bf16 %v578, %v578
      %703 = vmatpush.bf16.xpose.msra.mxu0 0
      %704 = vmatpush.bf16.xpose.msra.mxu0 0
      %705 = vmatpush.bf16.xpose.msra.mxu0 0
      %706 = vmatpush.bf16.xpose.msra.mxu0 0
      %707 = vmatpush.bf16.xpose.msra.mxu0 0
      %708 = vmatpush.bf16.xpose.msra.mxu0 0
      %709 = vmatpush.bf16.xpose.msra.mxu0 0
      %710 = vmatpush.bf16.xpose.msra.mxu0 %v700
      %711 = vmatmul.bf16.gmra.mxu0 %v697
      %v712 = vpop.f32.mrf.mxu0
      %v713 = vadd.f32 0.0, %v712
      %v714 = vpop.f32.mrf.mxu0
      %715 = vdwg.mxu0
      %716 = vmatpush.bf16.xpose.msra.mxu0 0
      %717 = vmatpush.bf16.xpose.msra.mxu0 0
      %718 = vmatpush.bf16.xpose.msra.mxu0 0
      %719 = vmatpush.bf16.xpose.msra.mxu0 0
      %720 = vmatpush.bf16.xpose.msra.mxu0 0
      %721 = vmatpush.bf16.xpose.msra.mxu0 0
      %722 = vmatpush.bf16.xpose.msra.mxu0 0
      %723 = vmatpush.bf16.xpose.msra.mxu0 %v701
      %724 = vmatmul.bf16.gmra.mxu0 %v698
      %v725 = vpop.f32.mrf.mxu0
      %v726 = vadd.f32 0.0, %v725
      %v727 = vpop.f32.mrf.mxu0
      %728 = vdwg.mxu0
      %729 = vmatpush.bf16.xpose.msra.mxu0 0
      %730 = vmatpush.bf16.xpose.msra.mxu0 0
      %731 = vmatpush.bf16.xpose.msra.mxu0 0
      %732 = vmatpush.bf16.xpose.msra.mxu0 0
      %733 = vmatpush.bf16.xpose.msra.mxu0 0
      %734 = vmatpush.bf16.xpose.msra.mxu0 0
      %735 = vmatpush.bf16.xpose.msra.mxu0 0
      %736 = vmatpush.bf16.xpose.msra.mxu0 %v702
      %737 = vmatmul.bf16.gmra.mxu0 %v699
      %v738 = vpop.f32.mrf.mxu0
      %v739 = vadd.f32 0.0, %v738
      %v740 = vpop.f32.mrf.mxu0
      %741 = vdwg.mxu0
      %v742 = vmul.f32 %v713, 0.088388346
      %v743 = vmul.f32 %v726, 0.088388346
      %v744 = vmul.f32 %v739, 0.088388346
      %v745 = vld [vmem:[%s454] sm:$0x1]
      %v746 = vld [vmem:[%s454 + $0x1] sm:$0x1]
      %v747 = vld [vmem:[%s454 + $0x2] sm:$0x1]
      %v748 = vadd.f32 %v742, %v745
      %v749 = vadd.f32 %v743, %v746
      %v750 = vadd.f32 %v744, %v747
      %vm751 = vcmask 57344
      %v752 = vsel %vm751, %v748, -inf
      %753 = vmax.xlane.f32.xlu0 %v752
      %v754 = vpop.xlane.xlu0 %753
      %v755 = vsel %vm751, %v749, -inf
      %756 = vmax.xlane.f32.xlu0 %v755
      %v757 = vpop.xlane.xlu0 %756
      %v758 = vsel %vm751, %v750, -inf
      %759 = vmax.xlane.f32.xlu0 %v758
      %v760 = vpop.xlane.xlu0 %759
      %v761 = vsub.f32 %v748, %v754
      %v762 = vsub.f32 %v749, %v757
      %v763 = vsub.f32 %v750, %v760
      %v764 = vmul.f32 %v761, 1.442695
      %v765 = vpow.pop %v764
      %v766 = vmul.f32 %v762, 1.442695
      %v767 = vpow.pop %v766
      %v768 = vmul.f32 %v763, 1.442695
      %v769 = vpow.pop %v768
      %v770 = vsel %vm751, %v765, 0.0
      %771 = vadd.xlane.f32.xlu0 %v770
      %v772 = vpop.xlane.xlu0 %771
      %v773 = vsel %vm751, %v767, 0.0
      %774 = vadd.xlane.f32.xlu0 %v773
      %v775 = vpop.xlane.xlu0 %774
      %v776 = vsel %vm751, %v769, 0.0
      %777 = vadd.xlane.f32.xlu0 %v776
      %v778 = vpop.xlane.xlu0 %777
      %v779 = vrcp.pop %v772
      %v780 = vrcp.pop %v775
      %v781 = vrcp.pop %v778
      %v782 = vmul.f32 %v765, %v779
      %v783 = vmul.f32 %v767, %v780
      %v784 = vmul.f32 %v769, %v781
      %v785 = vpack.c.bf16 %v782, %v782
      %v786 = vpack.c.bf16 %v783, %v783
      %v787 = vpack.c.bf16 %v784, %v784
      %v788 = vpack.c.bf16 %v591, %v591
      %v789 = vpack.c.bf16 %v593, %v593
      %v790 = vpack.c.bf16 %v596, %v596
      %vm791 = vcmask 64512
      %v793 = vsel %vm791, %v785, 0
      %vm795 = vcmask 1043456
      %v797 = vsel %vm795, %v788, 0
      %799 = vmatpush.bf16.msra.mxu0 0
      %800 = vmatpush.bf16.msra.mxu0 0
      %801 = vmatpush.bf16.msra.mxu0 0
      %802 = vmatpush.bf16.msra.mxu0 0
      %803 = vmatpush.bf16.msra.mxu0 0
      %804 = vmatpush.bf16.msra.mxu0 0
      %805 = vmatpush.bf16.msra.mxu0 0
      %806 = vmatpush.bf16.msra.mxu0 %v797
      %807 = vmatmul.bf16.gmra.mxu0 %v793
      %v808 = vpop.f32.mrf.mxu0
      %v809 = vadd.f32 0.0, %v808
      %v810 = vpop.f32.mrf.mxu0
      %811 = vdwg.mxu0
      %v813 = vsel %vm791, %v786, 0
      %v816 = vsel %vm795, %v789, 0
      %818 = vmatpush.bf16.msra.mxu0 0
      %819 = vmatpush.bf16.msra.mxu0 0
      %820 = vmatpush.bf16.msra.mxu0 0
      %821 = vmatpush.bf16.msra.mxu0 0
      %822 = vmatpush.bf16.msra.mxu0 0
      %823 = vmatpush.bf16.msra.mxu0 0
      %824 = vmatpush.bf16.msra.mxu0 0
      %825 = vmatpush.bf16.msra.mxu0 %v816
      %826 = vmatmul.bf16.gmra.mxu0 %v813
      %v827 = vpop.f32.mrf.mxu0
      %v828 = vadd.f32 0.0, %v827
      %v829 = vpop.f32.mrf.mxu0
      %830 = vdwg.mxu0
      %v832 = vsel %vm791, %v787, 0
      %v835 = vsel %vm795, %v790, 0
      %837 = vmatpush.bf16.msra.mxu0 0
      %838 = vmatpush.bf16.msra.mxu0 0
      %839 = vmatpush.bf16.msra.mxu0 0
      %840 = vmatpush.bf16.msra.mxu0 0
      %841 = vmatpush.bf16.msra.mxu0 0
      %842 = vmatpush.bf16.msra.mxu0 0
      %843 = vmatpush.bf16.msra.mxu0 0
      %844 = vmatpush.bf16.msra.mxu0 %v835
      %845 = vmatmul.bf16.gmra.mxu0 %v832
      %v846 = vpop.f32.mrf.mxu0
      %v847 = vadd.f32 0.0, %v846
      %v848 = vpop.f32.mrf.mxu0
      %849 = vdwg.mxu0
      %v850 = vpack.c.bf16 %v809, %v809
      %v851 = vpack.c.bf16 %v828, %v828
      %v852 = vpack.c.bf16 %v847, %v847
      %v853 = vld [vmem:[%s4] sm:$0xf]
      %v854 = vld [vmem:[%s4 + $0x4] sm:$0xf]
      %v855 = vld [vmem:[%s4 + $0x8] sm:$0xf]
      %v856 = vld [vmem:[%s4 + $0xc] sm:$0xf]
      %v857 = vld [vmem:[%s4 + $0x10] sm:$0xf]
      %v858 = vld [vmem:[%s4 + $0x14] sm:$0xf]
      %v859 = vld [vmem:[%s4 + $0x18] sm:$0xf]
      %v860 = vld [vmem:[%s4 + $0x1c] sm:$0xf]
      %v861 = vld [vmem:[%s4 + $0x20] sm:$0xf]
      %v862 = vld [vmem:[%s4 + $0x24] sm:$0xf]
      %v863 = vld [vmem:[%s4 + $0x28] sm:$0xf]
      %v864 = vld [vmem:[%s4 + $0x2c] sm:$0xf]
      %v865 = vld [vmem:[%s4 + $0x30] sm:$0xf]
      %v866 = vld [vmem:[%s4 + $0x34] sm:$0xf]
      %v867 = vld [vmem:[%s4 + $0x38] sm:$0xf]
      %v868 = vld [vmem:[%s4 + $0x3c] sm:$0xf]
      %v872 = vunpack.c.l.b16 %v850
      %v873 = vunpack.c.l.b16 %v851
      %v874 = vunpack.c.l.b16 %v852
      %v875 = vrot.slane %v873, 7
      %v876 = vsel %vm624, %v875, %v872
      %v877 = vrot.slane %v874, 6
      %v878 = vsel %vm627, %v877, %v876
      %v879 = vpack.c.b16 %v878, %v878
      %v897 = vunpack.c.l.b16 %v853
      %v898 = vunpack.c.l.b16 %v854
      %v899 = vunpack.c.l.b16 %v855
      %v900 = vunpack.c.l.b16 %v856
      %v901 = vunpack.c.l.b16 %v857
      %v902 = vunpack.c.l.b16 %v858
      %v903 = vunpack.c.l.b16 %v859
      %v904 = vunpack.c.l.b16 %v860
      %v905 = vunpack.c.l.b16 %v861
      %v906 = vunpack.c.l.b16 %v862
      %v907 = vunpack.c.l.b16 %v863
      %v908 = vunpack.c.l.b16 %v864
      %v909 = vunpack.c.l.b16 %v865
      %v910 = vunpack.c.l.b16 %v866
      %v911 = vunpack.c.l.b16 %v867
      %v912 = vunpack.c.l.b16 %v868
      %v913 = vpack.c.b16 %v898, %v897
      %v914 = vpack.c.b16 %v900, %v899
      %v915 = vpack.c.b16 %v902, %v901
      %v916 = vpack.c.b16 %v904, %v903
      %v917 = vpack.c.b16 %v906, %v905
      %v918 = vpack.c.b16 %v908, %v907
      %v919 = vpack.c.b16 %v910, %v909
      %v920 = vpack.c.b16 %v912, %v911
      %929 = vmatpush.bf16.msra.mxu0 %v920
      %930 = vmatpush.bf16.msra.mxu0 %v919
      %931 = vmatpush.bf16.msra.mxu0 %v918
      %932 = vmatpush.bf16.msra.mxu0 %v917
      %933 = vmatpush.bf16.msra.mxu0 %v916
      %934 = vmatpush.bf16.msra.mxu0 %v915
      %935 = vmatpush.bf16.msra.mxu0 %v914
      %936 = vmatpush.bf16.msra.mxu0 %v913
      %937 = vmatmul.bf16.gmra.mxu0 %v879
      %v938 = vpop.f32.mrf.mxu0
      %v939 = vadd.f32 0.0, %v938
      %v940 = vpop.f32.mrf.mxu0
      %941 = vdwg.mxu0
      %v943 = vrot.slane %v939, 1
      %v944 = vrot.slane %v939, 2
      %v948 = vadd.f32 %v462, %v939
      %v949 = vadd.f32 %v463, %v943
      %v950 = vadd.f32 %v464, %v944
      %v954 = vrot.slane %v949, 7
      %v955 = vsel %vm624, %v954, %v948
      %v956 = vrot.slane %v950, 6
      %v957 = vsel %vm627, %v956, %v955
      %vm959 = vcmask 1042432
      %v960 = vsel %vm959, %v957, 0.0
      %961 = vadd.xlane.f32.xlu0 %v960
      %v962 = vpop.xlane.xlu0 %961
      %v963 = vrcp.pop 128.0
      %v964 = vmul.f32 128.0, %v963
      %v965 = vsub.f32 1.0, %v964
      %v966 = vmul.f32 %v963, %v965
      %v967 = vadd.f32 %v963, %v966
      %vm968 = vweird.f32 %v963
      %v969 = vsel %vm968, %v963, %v967
      %v970 = vmul.f32 %v962, %v969
      %v972 = vrot.slane %v970, 1
      %v973 = vrot.slane %v970, 2
      %v977 = vsub.f32 %v948, %v970
      %v978 = vsub.f32 %v949, %v972
      %v979 = vsub.f32 %v950, %v973
      %v980 = vmul.f32 %v977, %v977
      %v981 = vmul.f32 %v978, %v978
      %v982 = vmul.f32 %v979, %v979
      %v986 = vrot.slane %v981, 7
      %v987 = vsel %vm624, %v986, %v980
      %v988 = vrot.slane %v982, 6
      %v989 = vsel %vm627, %v988, %v987
      %v991 = vsel %vm959, %v989, 0.0
      %992 = vadd.xlane.f32.xlu0 %v991
      %v993 = vpop.xlane.xlu0 %992
      %v994 = vmul.f32 %v993, %v969
      %v995 = vadd.f32 %v994, 1e-05
      %v996 = vrsqrt.pop %v995
      %v997 = vmul.f32 %v996, %v995
      %v998 = vmul.f32 %v997, %v996
      %v999 = vmul.f32 0.5, %v998
      %v1000 = vsub.f32 1.5, %v999
      %v1001 = vmul.f32 %v996, %v1000
      %vm1002 = vweird.f32 %v995
      %vm1003 = vweird.f32 %v996
      %vm1004 = vmor %vm1002, %vm1003
      %v1005 = vsel %vm1004, %v996, %v1001
      %v1007 = vrot.slane %v1005, 1
      %v1008 = vrot.slane %v1005, 2
      %v1012 = vmul.f32 %v977, %v1005
      %v1013 = vmul.f32 %v978, %v1007
      %v1014 = vmul.f32 %v979, %v1008
      %v1015 = vld [vmem:[%s5] sm:$0x1]
      %v1017 = vperm.slane %v1015, 0
      %v1019 = vmul.f32 %v1012, %v1017
      %v1020 = vmul.f32 %v1013, %v1017
      %v1021 = vmul.f32 %v1014, %v1017
      %v1022 = vld [vmem:[%s6] sm:$0x1]
      %v1024 = vperm.slane %v1022, 0
      %v1026 = vadd.f32 %v1019, %v1024
      %v1027 = vadd.f32 %v1020, %v1024
      %v1028 = vadd.f32 %v1021, %v1024
      %v1029 = vpack.c.bf16 %v1026, %v1026
      %v1030 = vpack.c.bf16 %v1027, %v1027
      %v1031 = vpack.c.bf16 %v1028, %v1028
      %v1032 = vld [vmem:[%s7] sm:$0xff]
      %v1033 = vld [vmem:[%s7 + $0x8] sm:$0xff]
      %v1034 = vld [vmem:[%s7 + $0x10] sm:$0xff]
      %v1035 = vld [vmem:[%s7 + $0x18] sm:$0xff]
      %v1036 = vld [vmem:[%s7 + $0x20] sm:$0xff]
      %v1037 = vld [vmem:[%s7 + $0x28] sm:$0xff]
      %v1038 = vld [vmem:[%s7 + $0x30] sm:$0xff]
      %v1039 = vld [vmem:[%s7 + $0x38] sm:$0xff]
      %v1040 = vld [vmem:[%s7 + $0x40] sm:$0xff]
      %v1041 = vld [vmem:[%s7 + $0x48] sm:$0xff]
      %v1042 = vld [vmem:[%s7 + $0x50] sm:$0xff]
      %v1043 = vld [vmem:[%s7 + $0x58] sm:$0xff]
      %v1044 = vld [vmem:[%s7 + $0x60] sm:$0xff]
      %v1045 = vld [vmem:[%s7 + $0x68] sm:$0xff]
      %v1046 = vld [vmem:[%s7 + $0x70] sm:$0xff]
      %v1047 = vld [vmem:[%s7 + $0x78] sm:$0xff]
      %v1048 = vld [vmem:[%s8] sm:$0x3]
      %v1050 = vperm.slane %v1048, 0
      %v1051 = vperm.slane %v1048, 1
      %v1057 = vunpack.c.l.b16 %v1029
      %v1058 = vunpack.c.l.b16 %v1030
      %v1059 = vunpack.c.l.b16 %v1031
      %v1060 = vrot.slane %v1058, 7
      %v1061 = vsel %vm624, %v1060, %v1057
      %v1062 = vrot.slane %v1059, 6
      %v1063 = vsel %vm627, %v1062, %v1061
      %v1064 = vpack.c.b16 %v1063, %v1063
      %v1082 = vunpack.c.l.b16 %v1032
      %v1083 = vunpack.c.h.b16 %v1032
      %v1084 = vunpack.c.l.b16 %v1033
      %v1085 = vunpack.c.h.b16 %v1033
      %v1086 = vunpack.c.l.b16 %v1034
      %v1087 = vunpack.c.h.b16 %v1034
      %v1088 = vunpack.c.l.b16 %v1035
      %v1089 = vunpack.c.h.b16 %v1035
      %v1090 = vunpack.c.l.b16 %v1036
      %v1091 = vunpack.c.h.b16 %v1036
      %v1092 = vunpack.c.l.b16 %v1037
      %v1093 = vunpack.c.h.b16 %v1037
      %v1094 = vunpack.c.l.b16 %v1038
      %v1095 = vunpack.c.h.b16 %v1038
      %v1096 = vunpack.c.l.b16 %v1039
      %v1097 = vunpack.c.h.b16 %v1039
      %v1098 = vunpack.c.l.b16 %v1040
      %v1099 = vunpack.c.h.b16 %v1040
      %v1100 = vunpack.c.l.b16 %v1041
      %v1101 = vunpack.c.h.b16 %v1041
      %v1102 = vunpack.c.l.b16 %v1042
      %v1103 = vunpack.c.h.b16 %v1042
      %v1104 = vunpack.c.l.b16 %v1043
      %v1105 = vunpack.c.h.b16 %v1043
      %v1106 = vunpack.c.l.b16 %v1044
      %v1107 = vunpack.c.h.b16 %v1044
      %v1108 = vunpack.c.l.b16 %v1045
      %v1109 = vunpack.c.h.b16 %v1045
      %v1110 = vunpack.c.l.b16 %v1046
      %v1111 = vunpack.c.h.b16 %v1046
      %v1112 = vunpack.c.l.b16 %v1047
      %v1113 = vunpack.c.h.b16 %v1047
      %v1114 = vpack.c.b16 %v1084, %v1082
      %v1115 = vpack.c.b16 %v1085, %v1083
      %v1116 = vpack.c.b16 %v1088, %v1086
      %v1117 = vpack.c.b16 %v1089, %v1087
      %v1118 = vpack.c.b16 %v1092, %v1090
      %v1119 = vpack.c.b16 %v1093, %v1091
      %v1120 = vpack.c.b16 %v1096, %v1094
      %v1121 = vpack.c.b16 %v1097, %v1095
      %v1122 = vpack.c.b16 %v1100, %v1098
      %v1123 = vpack.c.b16 %v1101, %v1099
      %v1124 = vpack.c.b16 %v1104, %v1102
      %v1125 = vpack.c.b16 %v1105, %v1103
      %v1126 = vpack.c.b16 %v1108, %v1106
      %v1127 = vpack.c.b16 %v1109, %v1107
      %v1128 = vpack.c.b16 %v1112, %v1110
      %v1129 = vpack.c.b16 %v1113, %v1111
      %1146 = vmatpush.bf16.msra.mxu0 %v1128
      %1147 = vmatpush.bf16.msra.mxu0 %v1126
      %1148 = vmatpush.bf16.msra.mxu0 %v1124
      %1149 = vmatpush.bf16.msra.mxu0 %v1122
      %1150 = vmatpush.bf16.msra.mxu0 %v1120
      %1151 = vmatpush.bf16.msra.mxu0 %v1118
      %1152 = vmatpush.bf16.msra.mxu0 %v1116
      %1153 = vmatpush.bf16.msra.mxu0 %v1114
      %1154 = vmatmul.bf16.gmra.mxu0 %v1064
      %v1155 = vpop.f32.mrf.mxu0
      %v1156 = vadd.f32 %v1050, %v1155
      %v1157 = vpop.f32.mrf.mxu0
      %1158 = vdwg.mxu0
      %1159 = vmatpush.bf16.msra.mxu0 %v1129
      %1160 = vmatpush.bf16.msra.mxu0 %v1127
      %1161 = vmatpush.bf16.msra.mxu0 %v1125
      %1162 = vmatpush.bf16.msra.mxu0 %v1123
      %1163 = vmatpush.bf16.msra.mxu0 %v1121
      %1164 = vmatpush.bf16.msra.mxu0 %v1119
      %1165 = vmatpush.bf16.msra.mxu0 %v1117
      %1166 = vmatpush.bf16.msra.mxu0 %v1115
      %1167 = vmatmul.bf16.gmra.mxu0 %v1064
      %v1168 = vpop.f32.mrf.mxu0
      %v1169 = vadd.f32 %v1051, %v1168
      %v1170 = vpop.f32.mrf.mxu0
      %1171 = vdwg.mxu0
      %v1172 = vmul.f32 %v1156, %v1156
      %v1173 = vmul.f32 %v1169, %v1169
      %v1174 = vmul.f32 %v1156, %v1172
      %v1175 = vmul.f32 %v1169, %v1173
      %v1176 = vmul.f32 %v1174, 0.044715
      %v1177 = vmul.f32 %v1175, 0.044715
      %v1178 = vadd.f32 %v1156, %v1176
      %v1179 = vadd.f32 %v1169, %v1177
      %v1180 = vmul.f32 %v1178, 0.7978846
      %v1181 = vmul.f32 %v1179, 0.7978846
      %v1182 = vtanh.pop %v1180
      %v1183 = vtanh.pop %v1181
      %v1184 = vadd.f32 %v1182, 1.0
      %v1185 = vadd.f32 %v1183, 1.0
      %v1186 = vmul.f32 %v1184, 0.5
      %v1187 = vmul.f32 %v1185, 0.5
      %v1188 = vmul.f32 %v1156, %v1186
      %v1189 = vmul.f32 %v1169, %v1187
      %v1190 = vpack.c.bf16 %v1188, %v1188
      %v1191 = vpack.c.bf16 %v1189, %v1189
      %v1192 = vld [vmem:[%s9] sm:$0xf]
      %v1193 = vld [vmem:[%s9 + $0x4] sm:$0xf]
      %v1194 = vld [vmem:[%s9 + $0x8] sm:$0xf]
      %v1195 = vld [vmem:[%s9 + $0xc] sm:$0xf]
      %v1196 = vld [vmem:[%s9 + $0x10] sm:$0xf]
      %v1197 = vld [vmem:[%s9 + $0x14] sm:$0xf]
      %v1198 = vld [vmem:[%s9 + $0x18] sm:$0xf]
      %v1199 = vld [vmem:[%s9 + $0x1c] sm:$0xf]
      %v1200 = vld [vmem:[%s9 + $0x20] sm:$0xf]
      %v1201 = vld [vmem:[%s9 + $0x24] sm:$0xf]
      %v1202 = vld [vmem:[%s9 + $0x28] sm:$0xf]
      %v1203 = vld [vmem:[%s9 + $0x2c] sm:$0xf]
      %v1204 = vld [vmem:[%s9 + $0x30] sm:$0xf]
      %v1205 = vld [vmem:[%s9 + $0x34] sm:$0xf]
      %v1206 = vld [vmem:[%s9 + $0x38] sm:$0xf]
      %v1207 = vld [vmem:[%s9 + $0x3c] sm:$0xf]
      %v1208 = vld [vmem:[%s9 + $0x40] sm:$0xf]
      %v1209 = vld [vmem:[%s9 + $0x44] sm:$0xf]
      %v1210 = vld [vmem:[%s9 + $0x48] sm:$0xf]
      %v1211 = vld [vmem:[%s9 + $0x4c] sm:$0xf]
      %v1212 = vld [vmem:[%s9 + $0x50] sm:$0xf]
      %v1213 = vld [vmem:[%s9 + $0x54] sm:$0xf]
      %v1214 = vld [vmem:[%s9 + $0x58] sm:$0xf]
      %v1215 = vld [vmem:[%s9 + $0x5c] sm:$0xf]
      %v1216 = vld [vmem:[%s9 + $0x60] sm:$0xf]
      %v1217 = vld [vmem:[%s9 + $0x64] sm:$0xf]
      %v1218 = vld [vmem:[%s9 + $0x68] sm:$0xf]
      %v1219 = vld [vmem:[%s9 + $0x6c] sm:$0xf]
      %v1220 = vld [vmem:[%s9 + $0x70] sm:$0xf]
      %v1221 = vld [vmem:[%s9 + $0x74] sm:$0xf]
      %v1222 = vld [vmem:[%s9 + $0x78] sm:$0xf]
      %v1223 = vld [vmem:[%s9 + $0x7c] sm:$0xf]
      %v1224 = vld [vmem:[%s10] sm:$0x1]
      %v1226 = vperm.slane %v1224, 0
      %v1260 = vunpack.c.l.b16 %v1192
      %v1261 = vunpack.c.l.b16 %v1193
      %v1262 = vunpack.c.l.b16 %v1194
      %v1263 = vunpack.c.l.b16 %v1195
      %v1264 = vunpack.c.l.b16 %v1196
      %v1265 = vunpack.c.l.b16 %v1197
      %v1266 = vunpack.c.l.b16 %v1198
      %v1267 = vunpack.c.l.b16 %v1199
      %v1268 = vunpack.c.l.b16 %v1200
      %v1269 = vunpack.c.l.b16 %v1201
      %v1270 = vunpack.c.l.b16 %v1202
      %v1271 = vunpack.c.l.b16 %v1203
      %v1272 = vunpack.c.l.b16 %v1204
      %v1273 = vunpack.c.l.b16 %v1205
      %v1274 = vunpack.c.l.b16 %v1206
      %v1275 = vunpack.c.l.b16 %v1207
      %v1276 = vunpack.c.l.b16 %v1208
      %v1277 = vunpack.c.l.b16 %v1209
      %v1278 = vunpack.c.l.b16 %v1210
      %v1279 = vunpack.c.l.b16 %v1211
      %v1280 = vunpack.c.l.b16 %v1212
      %v1281 = vunpack.c.l.b16 %v1213
      %v1282 = vunpack.c.l.b16 %v1214
      %v1283 = vunpack.c.l.b16 %v1215
      %v1284 = vunpack.c.l.b16 %v1216
      %v1285 = vunpack.c.l.b16 %v1217
      %v1286 = vunpack.c.l.b16 %v1218
      %v1287 = vunpack.c.l.b16 %v1219
      %v1288 = vunpack.c.l.b16 %v1220
      %v1289 = vunpack.c.l.b16 %v1221
      %v1290 = vunpack.c.l.b16 %v1222
      %v1291 = vunpack.c.l.b16 %v1223
      %v1292 = vpack.c.b16 %v1261, %v1260
      %v1293 = vpack.c.b16 %v1263, %v1262
      %v1294 = vpack.c.b16 %v1265, %v1264
      %v1295 = vpack.c.b16 %v1267, %v1266
      %v1296 = vpack.c.b16 %v1269, %v1268
      %v1297 = vpack.c.b16 %v1271, %v1270
      %v1298 = vpack.c.b16 %v1273, %v1272
      %v1299 = vpack.c.b16 %v1275, %v1274
      %v1300 = vpack.c.b16 %v1277, %v1276
      %v1301 = vpack.c.b16 %v1279, %v1278
      %v1302 = vpack.c.b16 %v1281, %v1280
      %v1303 = vpack.c.b16 %v1283, %v1282
      %v1304 = vpack.c.b16 %v1285, %v1284
      %v1305 = vpack.c.b16 %v1287, %v1286
      %v1306 = vpack.c.b16 %v1289, %v1288
      %v1307 = vpack.c.b16 %v1291, %v1290
      %1324 = vmatpush.bf16.msra.mxu0 %v1299
      %1325 = vmatpush.bf16.msra.mxu0 %v1298
      %1326 = vmatpush.bf16.msra.mxu0 %v1297
      %1327 = vmatpush.bf16.msra.mxu0 %v1296
      %1328 = vmatpush.bf16.msra.mxu0 %v1295
      %1329 = vmatpush.bf16.msra.mxu0 %v1294
      %1330 = vmatpush.bf16.msra.mxu0 %v1293
      %1331 = vmatpush.bf16.msra.mxu0 %v1292
      %1332 = vmatmul.bf16.gmra.mxu0 %v1190
      %v1333 = vpop.f32.mrf.mxu0
      %v1334 = vadd.f32 %v1226, %v1333
      %v1335 = vpop.f32.mrf.mxu0
      %1336 = vdwg.mxu0
      %1337 = vmatpush.bf16.msra.mxu0 %v1307
      %1338 = vmatpush.bf16.msra.mxu0 %v1306
      %1339 = vmatpush.bf16.msra.mxu0 %v1305
      %1340 = vmatpush.bf16.msra.mxu0 %v1304
      %1341 = vmatpush.bf16.msra.mxu0 %v1303
      %1342 = vmatpush.bf16.msra.mxu0 %v1302
      %1343 = vmatpush.bf16.msra.mxu0 %v1301
      %1344 = vmatpush.bf16.msra.mxu0 %v1300
      %1345 = vmatmul.bf16.gmra.mxu0 %v1191
      %v1346 = vpop.f32.mrf.mxu0
      %v1347 = vadd.f32 %v1334, %v1346
      %v1348 = vpop.f32.mrf.mxu0
      %1349 = vdwg.mxu0
      %v1351 = vrot.slane %v1347, 1
      %v1352 = vrot.slane %v1347, 2
      %v1356 = vadd.f32 %v1026, %v1347
      %v1357 = vadd.f32 %v1027, %v1351
      %v1358 = vadd.f32 %v1028, %v1352
      %v1362 = vrot.slane %v1357, 7
      %v1363 = vsel %vm624, %v1362, %v1356
      %v1364 = vrot.slane %v1358, 6
      %v1365 = vsel %vm627, %v1364, %v1363
      %v1367 = vsel %vm959, %v1365, 0.0
      %1368 = vadd.xlane.f32.xlu0 %v1367
      %v1369 = vpop.xlane.xlu0 %1368
      %v1370 = vmul.f32 %v1369, %v969
      %v1372 = vrot.slane %v1370, 1
      %v1373 = vrot.slane %v1370, 2
      %v1377 = vsub.f32 %v1356, %v1370
      %v1378 = vsub.f32 %v1357, %v1372
      %v1379 = vsub.f32 %v1358, %v1373
      %v1380 = vmul.f32 %v1377, %v1377
      %v1381 = vmul.f32 %v1378, %v1378
      %v1382 = vmul.f32 %v1379, %v1379
      %v1386 = vrot.slane %v1381, 7
      %v1387 = vsel %vm624, %v1386, %v1380
      %v1388 = vrot.slane %v1382, 6
      %v1389 = vsel %vm627, %v1388, %v1387
      %v1391 = vsel %vm959, %v1389, 0.0
      %1392 = vadd.xlane.f32.xlu0 %v1391
      %v1393 = vpop.xlane.xlu0 %1392
      %v1394 = vmul.f32 %v1393, %v969
      %v1395 = vadd.f32 %v1394, 1e-05
      %v1396 = vrsqrt.pop %v1395
      %v1397 = vmul.f32 %v1396, %v1395
      %v1398 = vmul.f32 %v1397, %v1396
      %v1399 = vmul.f32 0.5, %v1398
      %v1400 = vsub.f32 1.5, %v1399
      %v1401 = vmul.f32 %v1396, %v1400
      %vm1402 = vweird.f32 %v1395
      %vm1403 = vweird.f32 %v1396
      %vm1404 = vmor %vm1402, %vm1403
      %v1405 = vsel %vm1404, %v1396, %v1401
      %v1407 = vrot.slane %v1405, 1
      %v1408 = vrot.slane %v1405, 2
      %v1412 = vmul.f32 %v1377, %v1405
      %v1413 = vmul.f32 %v1378, %v1407
      %v1414 = vmul.f32 %v1379, %v1408
      %v1415 = vld [vmem:[%s11] sm:$0x1]
      %v1417 = vperm.slane %v1415, 0
      %v1419 = vmul.f32 %v1412, %v1417
      %v1420 = vmul.f32 %v1413, %v1417
      %v1421 = vmul.f32 %v1414, %v1417
      %v1422 = vld [vmem:[%s12] sm:$0x1]
      %v1424 = vperm.slane %v1422, 0
      %v1426 = vadd.f32 %v1419, %v1424
      %v1427 = vadd.f32 %v1420, %v1424
      %v1428 = vadd.f32 %v1421, %v1424
      %1429 = vst [vmem:[%s459] sm:$0x1] %v1426
      %1430 = vst [vmem:[%s459 + $0x1] sm:$0x1] %v1427
      %1431 = vst [vmem:[%s459 + $0x2] sm:$0x1] %v1428
      %s1432 = smul.u32 3, %s24
      %p1433 = scmp.lt.s32.totalorder %s1432, 5
      %s1434 = scalar_select %p1433, %s1432, 5
      %s1435 = scalar_lea.vmem %s13, %s1434
      // Predicated region
      $region73: #{clspooling_clone_detect_forward.2} parent=71 // pred_check
        %p1436 = pneg %p325
      $region74: #{clspooling_clone_detect_forward.2} parent=71 // pred_check_branch
        %1438 = sbr.rel (%p1436) target = $region76
      $region75: #{clspooling_clone_detect_forward.2} parent=71 // pred_region
        %s1439 = smul.u32 3, %s24
      $region76: #{clspooling_clone_detect_forward.2} parent=71 // pred_fallthru
        _
    $region72: #{clspooling_clone_detect_forward.2} parent=5 // pred_fallthru
      _
    %p1440 = scmp.le.s32.totalorder 2, %s19
    // Predicated region
    $region77: #{clspooling_clone_detect_forward.2} parent=5 // pred_check
      %p1441 = pneg %p1440
    $region78: #{clspooling_clone_detect_forward.2} parent=5 // pred_check_branch
      %1443 = sbr.rel (%p1441) target = $region80
    $region79: #{clspooling_clone_detect_forward.2} parent=5 // pred_region
      %s1444 = ssub.s32 %s19, 2
      // Predicated region
      $region81: #{clspooling_clone_detect_forward.2} parent=79 // pred_check
        %p1445 = pneg %p331
      $region82: #{clspooling_clone_detect_forward.2} parent=79 // pred_check_branch
        %1447 = sbr.rel (%p1445) target = $region84
      $region83: #{clspooling_clone_detect_forward.2} parent=79 // pred_region
        %s1448 = smul.u32 3, %s25
        %p1449 = scmp.lt.s32.totalorder %s1448, 5
        %s1450 = scalar_select %p1449, %s1448, 5
        %s1451 = scalar_lea.vmem %s13, %s1450
      $region84: #{clspooling_clone_detect_forward.2} parent=79 // pred_fallthru
        _
    $region80: #{clspooling_clone_detect_forward.2} parent=5 // pred_fallthru
      _
  $region6: #{clspooling_clone_detect_forward.2} parent=0 // loop_footer
    %s23 = sadd.s32 1, %s19
  $region7: #{clspooling_clone_detect_forward.2} parent=0 // loop_footer_branch
    %18 = sbr.rel target = $region3
  $region8: #{clspooling_clone_detect_forward.2} parent=0 // loop_exit
    _

</llo_original>
